<compile_context>
chip_gen: v6e
topology: v6e:2x2x1
jax: 0.10.0
libtpu: 0.0.40
codegen_flags: <defaults>
</compile_context>

<pallas_src>
import functools

import jax
import jax.numpy as jnp
from jax.experimental import pallas as pl
from jax.experimental.pallas import tpu as pltpu


def _round_up(a: int, b: int) -> int:
    return ((a + b - 1) // b) * b


# --------------------------------------------------------------------------------------
# Kernels
# --------------------------------------------------------------------------------------

def _mlp_kernel_single(x_ref, w1_ref, b1_ref, w2_ref, b2_ref, o_ref, *, approximate_gelu):
    """Whole hidden dim in one chunk: no accumulator, write output directly."""
    h = jnp.dot(x_ref[...], w1_ref[...], preferred_element_type=jnp.float32)
    h = jax.nn.gelu(h + b1_ref[...], approximate=approximate_gelu)
    out = jnp.dot(h.astype(w2_ref.dtype), w2_ref[...], preferred_element_type=jnp.float32)
    o_ref[...] = (out + b2_ref[...]).astype(o_ref.dtype)
    # Dropout with drop=0.0 is the identity -- nothing to do.


def _mlp_kernel_chunked(x_ref, w1_ref, b1_ref, w2_ref, b2_ref, o_ref, acc_ref, *,
                        approximate_gelu):
    """Hidden dim tiled along a trailing 'arbitrary' grid axis with an f32 accumulator."""
    k = pl.program_id(1)

    @pl.when(k == 0)
    def _init():
        acc_ref[...] = jnp.zeros_like(acc_ref)

    h = jnp.dot(x_ref[...], w1_ref[...], preferred_element_type=jnp.float32)
    h = jax.nn.gelu(h + b1_ref[...], approximate=approximate_gelu)
    acc_ref[...] += jnp.dot(h.astype(w2_ref.dtype), w2_ref[...],
                            preferred_element_type=jnp.float32)

    @pl.when(k == pl.num_programs(1) - 1)
    def _finalize():
        o_ref[...] = (acc_ref[...] + b2_ref[...]).astype(o_ref.dtype)


# --------------------------------------------------------------------------------------
# Tile / VMEM budgeting
# --------------------------------------------------------------------------------------

def _vmem_budget():
    """(physical_capacity, usable_budget) in bytes; conservative (v7x-safe) fallback."""
    cap = 64 << 20
    try:
        info = pltpu.get_tpu_info()
        cap = int(getattr(info, "vmem_capacity_bytes", cap)) or cap
    except Exception:
        pass
    budget = min(cap - (12 << 20), 100 << 20)   # leave headroom for compiler scratch
    return cap, max(budget, 16 << 20)


def _footprint_bytes(tm, th, din_p, dout_p, cdsz, osz, chunked):
    f = 2 * tm * din_p * cdsz          # x tile (double-buffered)
    f += 2 * din_p * th * cdsz         # w1 chunk
    f += 2 * 8 * th * 4                # b1 (f32, sublane-padded)
    f += 2 * th * dout_p * cdsz        # w2 chunk
    f += 2 * 8 * dout_p * 4            # b2
    f += 2 * tm * dout_p * osz         # out tile
    f += 2 * tm * th * 4               # live f32 hidden intermediate
    if chunked:
        f += tm * dout_p * 4           # accumulator scratch
    return f


def _select_tiles(M, din_p, h_p, dout_p, cdsz, osz, budget, tm_target):
    sub = 16 if cdsz == 2 else 8                      # sublane multiple per dtype
    m_min = _round_up(M, sub)
    tm = min(_round_up(tm_target, sub), m_min)
    # >= 2 row tiles when possible so v7x's 2 TensorCores both get work.
    if m_min >= 2 * sub and -(-m_min // tm) < 2:
        tm = _round_up(-(-m_min // 2), sub)
    # Shrink rows if even a minimal 128-wide hidden chunk would blow the budget.
    while tm > sub and _footprint_bytes(tm, 128, din_p, dout_p, cdsz, osz, True) > budget:
        tm = max(sub, _round_up(tm // 2, sub))
    # Prefer a single hidden chunk: weights resident, no accumulator round-trips.
    if _footprint_bytes(tm, h_p, din_p, dout_p, cdsz, osz, False) <= budget:
        return tm, h_p, False
    th = h_p
    while th > 128:
        th = max(128, _round_up(th // 2, 128))
        if _footprint_bytes(tm, th, din_p, dout_p, cdsz, osz, True) <= budget:
            break
    return tm, th, True


# --------------------------------------------------------------------------------------
# Wrapper
# --------------------------------------------------------------------------------------

def prepare_mlp_params(w1, b1, w2, b2, *, compute_dtype=jnp.bfloat16):
    """Pad weights to lane-dense shapes and cast to the MXU compute dtype, once."""
    D_in, H = int(w1.shape[0]), int(w1.shape[1])
    D_out = int(w2.shape[1])
    din_p, h_p, dout_p = _round_up(D_in, 128), _round_up(H, 128), _round_up(D_out, 128)

    w1p = jnp.pad(w1, ((0, din_p - D_in), (0, h_p - H))) if (din_p != D_in or h_p != H) else w1
    w2p = jnp.pad(w2, ((0, h_p - H), (0, dout_p - D_out))) if (h_p != H or dout_p != D_out) else w2
    b1p = jnp.pad(b1, ((0, h_p - H),)) if h_p != H else b1
    b2p = jnp.pad(b2, ((0, dout_p - D_out),)) if dout_p != D_out else b2

    return dict(
        w1=w1p.astype(compute_dtype),
        b1=b1p.reshape(1, h_p).astype(jnp.float32),
        w2=w2p.astype(compute_dtype),
        b2=b2p.reshape(1, dout_p).astype(jnp.float32),
        dims=(D_in, H, D_out),
        padded_dims=(din_p, h_p, dout_p),
        compute_dtype=jnp.dtype(compute_dtype),
    )


def mlp_pallas(x, params, *, approximate_gelu=True, tm_target=512):
    """x: (B, N, D_in) -> (B, N, D_out).  fc1 -> GELU -> fc2 on the last axis."""
    cd = params["compute_dtype"]
    D_in, H, D_out = params["dims"]
    din_p, h_p, dout_p = params["padded_dims"]
    w1p, b1p, w2p, b2p = params["w1"], params["b1"], params["w2"], params["b2"]

    B, N, _ = x.shape
    M = B * N
    out_dtype = x.dtype
    cdsz = cd.itemsize
    osz = jnp.dtype(out_dtype).itemsize

    cap, budget = _vmem_budget()
    tm, th, chunked = _select_tiles(M, din_p, h_p, dout_p, cdsz, osz, budget, tm_target)
    m_p = _round_up(M, tm)

    # x is cast to the compute dtype; pad rows/features only when needed.
    x2d = x.reshape(M, D_in).astype(cd)
    if m_p != M or din_p != D_in:
        x2d = jnp.pad(x2d, ((0, m_p - M), (0, din_p - D_in)))

    # Rare: hidden chunk does not divide the 128-padded hidden dim -> pad a bit further.
    if chunked and h_p % th:
        h_pp = _round_up(h_p, th)
        w1p = jnp.pad(w1p, ((0, 0), (0, h_pp - h_p)))
        b1p = jnp.pad(b1p, ((0, 0), (0, h_pp - h_p)))
        w2p = jnp.pad(w2p, ((0, h_pp - h_p), (0, 0)))
        h_p = h_pp

    fp = _footprint_bytes(tm, th, din_p, dout_p, cdsz, osz, chunked)
    vmem_limit = max(fp + (8 << 20), 32 << 20)
    vmem_limit = int(min(vmem_limit, cap - (2 << 20)))

    grid_rows = m_p // tm
    cost = pl.CostEstimate(
        flops=2 * M * (D_in * H + H * D_out),
        transcendentals=(M * H) if approximate_gelu else 0,
        bytes_accessed=(M * D_in * cdsz + M * D_out * osz
                        + (w1p.size + w2p.size) * cdsz * (grid_rows if chunked else 1)
                        + (b1p.size + b2p.size) * 4),
    )

    if not chunked:
        kernel = functools.partial(_mlp_kernel_single, approximate_gelu=approximate_gelu)
        grid_spec = pltpu.PrefetchScalarGridSpec(
            num_scalar_prefetch=0,
            grid=(grid_rows,),
            in_specs=[
                pl.BlockSpec((tm, din_p), lambda i: (i, 0)),      # x rows
                pl.BlockSpec((din_p, h_p), lambda i: (0, 0)),     # w1 (resident)
                pl.BlockSpec((1, h_p), lambda i: (0, 0)),         # b1
                pl.BlockSpec((h_p, dout_p), lambda i: (0, 0)),    # w2 (resident)
                pl.BlockSpec((1, dout_p), lambda i: (0, 0)),      # b2
            ],
            out_specs=pl.BlockSpec((tm, dout_p), lambda i: (i, 0)),
        )
        dims_sem = ("parallel",)
    else:
        kernel = functools.partial(_mlp_kernel_chunked, approximate_gelu=approximate_gelu)
        grid_spec = pltpu.PrefetchScalarGridSpec(
            num_scalar_prefetch=0,
            grid=(grid_rows, h_p // th),
            in_specs=[
                pl.BlockSpec((tm, din_p), lambda i, k: (i, 0)),   # x rows
                pl.BlockSpec((din_p, th), lambda i, k: (0, k)),   # w1 hidden chunk
                pl.BlockSpec((1, th), lambda i, k: (0, k)),       # b1 hidden chunk
                pl.BlockSpec((th, dout_p), lambda i, k: (k, 0)),  # w2 hidden chunk
                pl.BlockSpec((1, dout_p), lambda i, k: (0, 0)),   # b2
            ],
            out_specs=pl.BlockSpec((tm, dout_p), lambda i, k: (i, 0)),
            scratch_shapes=[pltpu.VMEM((tm, dout_p), jnp.float32)],
        )
        dims_sem = ("parallel", "arbitrary")

    out2d = pl.pallas_call(
        kernel,
        out_shape=jax.ShapeDtypeStruct((m_p, dout_p), out_dtype),
        grid_spec=grid_spec,
        compiler_params=pltpu.CompilerParams(
            dimension_semantics=dims_sem,
            vmem_limit_bytes=vmem_limit,
        ),
        cost_estimate=cost,
    )(x2d, w1p, b1p, w2p, b2p)

    if m_p != M or dout_p != D_out:
        out2d = out2d[:M, :D_out]
    return out2d.reshape(B, N, D_out)


# --------------------------------------------------------------------------------------
# Test harness
# --------------------------------------------------------------------------------------

def _init_params(key, in_features, hidden_features, out_features, dtype=jnp.float32):
    # Matches nn.Linear default init: U(-1/sqrt(fan_in), 1/sqrt(fan_in)).
    k1, k2, k3, k4 = jax.random.split(key, 4)
    lim1 = 1.0 / jnp.sqrt(in_features)
    lim2 = 1.0 / jnp.sqrt(hidden_features)
    w1 = jax.random.uniform(k1, (in_features, hidden_features), dtype, -lim1, lim1)
    b1 = jax.random.uniform(k2, (hidden_features,), dtype, -lim1, lim1)
    w2 = jax.random.uniform(k3, (hidden_features, out_features), dtype, -lim2, lim2)
    b2 = jax.random.uniform(k4, (out_features,), dtype, -lim2, lim2)
    return w1, b1, w2, b2


if __name__ == "__main__":
    jax.config.update("jax_default_matmul_precision", "highest")

    key = jax.random.PRNGKey(0)
    kx1, kp1, kx2, kp2 = jax.random.split(key, 4)

    # Case 1: f32 compute dtype, tanh GELU -- tight numeric check vs a pure-JAX reference.
    B, N, D_in, H, D_out = 2, 8, 32, 128, 32
    x = jax.random.normal(kx1, (B, N, D_in), jnp.float32)
    w1, b1, w2, b2 = _init_params(kp1, D_in, H, D_out)
    params_f32 = prepare_mlp_params(w1, b1, w2, b2, compute_dtype=jnp.float32)
    out = jax.block_until_ready(mlp_pallas(x, params_f32))
    ref = jax.nn.gelu(x @ w1 + b1, approximate=True) @ w2 + b2
    assert out.shape == (B, N, D_out)
    assert jnp.allclose(out, ref, atol=1e-4, rtol=1e-4), "mismatch vs reference (case 1)"

    # Case 2: awkward shapes + default bf16 MXU fast path (exercises padding + multi-tile M).
    B2, N2, D_in2, H2, D_out2 = 3, 7, 40, 96, 24
    x2 = jax.random.normal(kx2, (B2, N2, D_in2), jnp.float32)
    w1b, b1b, w2b, b2b = _init_params(kp2, D_in2, H2, D_out2)
    params_bf16 = prepare_mlp_params(w1b, b1b, w2b, b2b, compute_dtype=jnp.bfloat16)
    out2 = jax.block_until_ready(mlp_pallas(x2, params_bf16))
    ref2 = jax.nn.gelu(x2 @ w1b + b1b, approximate=True) @ w2b + b2b
    assert out2.shape == (B2, N2, D_out2)
    err = float(jnp.max(jnp.abs(out2 - ref2)))
    assert err < 5e-2, f"mismatch vs reference (case 2): max abs err {err}"

    print("KERNEL_OK")
</pallas_src>

<mosaic_0001>
module attributes {stable_mosaic.version = 11 : i64} {
  func.func @_mlp_kernel_single(%arg0: i32, %arg1: memref<8x128xf32, #tpu.memory_space<vmem>>, %arg2: memref<128x128xf32, #tpu.memory_space<vmem>>, %arg3: memref<1x128xf32, #tpu.memory_space<vmem>>, %arg4: memref<128x128xf32, #tpu.memory_space<vmem>>, %arg5: memref<1x128xf32, #tpu.memory_space<vmem>>, %arg6: memref<8x128xf32, #tpu.memory_space<vmem>>) attributes {dimension_semantics = [#tpu.dimension_semantics<parallel>], iteration_bounds = array<i64: 2>, scalar_prefetch = 0 : i64, scratch_operands = 0 : i64, tpu.core_type = #tpu.core_type<tc>, window_params = [{transform_indices = @transform_0, window_bounds = array<i64: 8, 128>}, {pipeline_mode = #tpu.pipeline_mode<synchronous>, transform_indices = @transform_1, window_bounds = array<i64: 128, 128>}, {pipeline_mode = #tpu.pipeline_mode<synchronous>, transform_indices = @transform_2, window_bounds = array<i64: 1, 128>}, {pipeline_mode = #tpu.pipeline_mode<synchronous>, transform_indices = @transform_3, window_bounds = array<i64: 128, 128>}, {pipeline_mode = #tpu.pipeline_mode<synchronous>, transform_indices = @transform_4, window_bounds = array<i64: 1, 128>}, {transform_indices = @transform_5, window_bounds = array<i64: 8, 128>}]} {
    %c0 = arith.constant 0 : index
    %c0_0 = arith.constant 0 : index
    %0 = vector.load %arg1[%c0, %c0_0] : memref<8x128xf32, #tpu.memory_space<vmem>>, vector<8x128xf32>
    %c0_1 = arith.constant 0 : index
    %c0_2 = arith.constant 0 : index
    %1 = vector.load %arg2[%c0_1, %c0_2] : memref<128x128xf32, #tpu.memory_space<vmem>>, vector<128x128xf32>
    %cst = arith.constant dense<0.000000e+00> : vector<8x128xf32>
    %2 = tpu.matmul %0, %1, %cst {dimension_numbers = #tpu.dot_dimension_numbers<[1], [0], [0], [1], [0, 0, 1, 1], [], []>, precision = #tpu.contract_precision<fp32>} : vector<8x128xf32>, vector<128x128xf32>, vector<8x128xf32> -> vector<8x128xf32>
    %c0_3 = arith.constant 0 : index
    %c0_4 = arith.constant 0 : index
    %3 = vector.load %arg3[%c0_3, %c0_4] : memref<1x128xf32, #tpu.memory_space<vmem>>, vector<1x128xf32>
    %4 = vector.broadcast %3 : vector<1x128xf32> to vector<8x128xf32>
    %5 = arith.addf %2, %4 : vector<8x128xf32>
    %6 = arith.mulf %5, %5 : vector<8x128xf32>
    %7 = arith.mulf %5, %6 : vector<8x128xf32>
    %cst_5 = arith.constant 4.471500e-02 : f32
    %8 = vector.broadcast %cst_5 : f32 to vector<8x128xf32>
    %9 = arith.mulf %8, %7 : vector<8x128xf32>
    %10 = arith.addf %5, %9 : vector<8x128xf32>
    %cst_6 = arith.constant 0.797884583 : f32
    %11 = vector.broadcast %cst_6 : f32 to vector<8x128xf32>
    %12 = arith.mulf %11, %10 : vector<8x128xf32>
    %13 = math.tanh %12 : vector<8x128xf32>
    %cst_7 = arith.constant 1.000000e+00 : f32
    %14 = vector.broadcast %cst_7 : f32 to vector<8x128xf32>
    %15 = arith.addf %14, %13 : vector<8x128xf32>
    %cst_8 = arith.constant 5.000000e-01 : f32
    %16 = vector.broadcast %cst_8 : f32 to vector<8x128xf32>
    %17 = arith.mulf %16, %15 : vector<8x128xf32>
    %18 = arith.mulf %5, %17 : vector<8x128xf32>
    %c0_9 = arith.constant 0 : index
    %c0_10 = arith.constant 0 : index
    %19 = vector.load %arg4[%c0_9, %c0_10] : memref<128x128xf32, #tpu.memory_space<vmem>>, vector<128x128xf32>
    %cst_11 = arith.constant dense<0.000000e+00> : vector<8x128xf32>
    %20 = tpu.matmul %18, %19, %cst_11 {dimension_numbers = #tpu.dot_dimension_numbers<[1], [0], [0], [1], [0, 0, 1, 1], [], []>, precision = #tpu.contract_precision<fp32>} : vector<8x128xf32>, vector<128x128xf32>, vector<8x128xf32> -> vector<8x128xf32>
    %c0_12 = arith.constant 0 : index
    %c0_13 = arith.constant 0 : index
    %21 = vector.load %arg5[%c0_12, %c0_13] : memref<1x128xf32, #tpu.memory_space<vmem>>, vector<1x128xf32>
    %22 = vector.broadcast %21 : vector<1x128xf32> to vector<8x128xf32>
    %23 = arith.addf %20, %22 : vector<8x128xf32>
    %c0_14 = arith.constant 0 : index
    %c0_15 = arith.constant 0 : index
    %24 = vector.load %arg6[%c0_14, %c0_15] : memref<8x128xf32, #tpu.memory_space<vmem>>, vector<8x128xf32>
    tpu.vector_store %arg6[%c0_14, %c0_15], %23 {strides = array<i32>} : memref<8x128xf32, #tpu.memory_space<vmem>>, vector<8x128xf32>,
    return
  }
  func.func @transform_0(%arg0: i32) -> (i32, i32) {
    %c0_i32 = arith.constant 0 : i32
    %c0_i32_0 = arith.constant 0 : i32
    return %arg0, %c0_i32 : i32, i32
  }
  func.func @transform_1(%arg0: i32) -> (i32, i32) {
    %c0_i32 = arith.constant 0 : i32
    %c0_i32_0 = arith.constant 0 : i32
    %c0_i32_1 = arith.constant 0 : i32
    return %c0_i32, %c0_i32_0 : i32, i32
  }
  func.func @transform_2(%arg0: i32) -> (i32, i32) {
    %c0_i32 = arith.constant 0 : i32
    %c0_i32_0 = arith.constant 0 : i32
    %c0_i32_1 = arith.constant 0 : i32
    return %c0_i32, %c0_i32_0 : i32, i32
  }
  func.func @transform_3(%arg0: i32) -> (i32, i32) {
    %c0_i32 = arith.constant 0 : i32
    %c0_i32_0 = arith.constant 0 : i32
    %c0_i32_1 = arith.constant 0 : i32
    return %c0_i32, %c0_i32_0 : i32, i32
  }
  func.func @transform_4(%arg0: i32) -> (i32, i32) {
    %c0_i32 = arith.constant 0 : i32
    %c0_i32_0 = arith.constant 0 : i32
    %c0_i32_1 = arith.constant 0 : i32
    return %c0_i32, %c0_i32_0 : i32, i32
  }
  func.func @transform_5(%arg0: i32) -> (i32, i32) {
    %c0_i32 = arith.constant 0 : i32
    %c0_i32_0 = arith.constant 0 : i32
    return %arg0, %c0_i32 : i32, i32
  }
}

</mosaic_0001>

<llo_original>
// kernel: tpu_custom_call.1
$region0: #{tpu_custom_call.1}
  #allocation0 [shape = 'u32[]', space=smem, size = 0x4, offset = 0x4, fixed_abs, tag = 'smem constant byte address 0x4 - core index']
  #allocation1 [shape = 'u32[144,128]{1,0:T(1,128)}', space=vmem, size = 0x12000, scoped, tag = 'internal scratch']
  %s0 = inlined_call_operand.hbm [shape: f32[16,128], index: 0, kind: input, shape index: {}]
  %s1 = inlined_call_operand.hbm [shape: f32[128,128], index: 1, kind: input, shape index: {}]
  %s2 = inlined_call_operand.vmem [shape: f32[1,128], index: 2, kind: input, shape index: {}]
  %s3 = inlined_call_operand.hbm [shape: f32[128,128], index: 3, kind: input, shape index: {}]
  %s4 = inlined_call_operand.vmem [shape: f32[1,128], index: 4, kind: input, shape index: {}]
  %s5 = inlined_call_operand.hbm [shape: f32[16,128], index: 5, kind: output, shape index: {}]
  %s6 = sld [smem:[#allocation0]]
  $region65: #{tpu_custom_call.1} parent=0
    _
  %s8 = ssub.s32 1, %s6
  %s9 = scalar_select 0, %s8, %s6
  $region1: #{tpu_custom_call.1} parent=0
    #allocation2 [shape = 'u8[8192]{0}', space=vmem, size = 0x2000, scoped, tag = 'input window, operand 0']
    #allocation3 [shape = 's32[2]{0}', space=sflag, size = 0x8, scoped, tag = 'scoped memory for tpu_custom_call.1']
    #allocation4 [shape = 's32[2]{0}', space=sflag, size = 0x8, scoped, tag = 'scoped memory for tpu_custom_call.1']
    #allocation5 [shape = 'u8[65536]{0}', space=vmem, size = 0x10000, scoped, tag = 'input window, operand 1, single buffered']
    #allocation6 [shape = 's32[1]{0}', space=sflag, size = 0x4, scoped, tag = 'scoped memory for tpu_custom_call.1']
    #allocation7 [shape = 'u8[65536]{0}', space=vmem, size = 0x10000, scoped, tag = 'input window, operand 3, single buffered']
    #allocation8 [shape = 'u8[8192]{0}', space=vmem, size = 0x2000, scoped, tag = 'output window, operand 0']
    %10 = vsyncpa [#allocation3], 0
    %s11 = scalar_lea.sflag [#allocation3], 1
    %12 = vsyncpa %s11, 0
    %13 = vsyncpa [#allocation6], 0
    %14 = vsyncpa [#allocation4], 0
    %s15 = scalar_lea.sflag [#allocation4], 1
    %16 = vsyncpa %s15, 0
    loop: start=0, step=1, limit=4
    $region2: #{tpu_custom_call.1} parent=1 // loop_pre_header
      _
    $region3: #{tpu_custom_call.1} parent=1 // loop_header
      %s18 = sphi 0, %s22
      %p19 = scmp.ge.s32.totalorder %s18, 4
      %s28 = sphi 0, %s30
      %s31 = sphi 0, %s28
      %s32 = sphi 0, %s31
      %s48 = sphi 0, %s32
      %s52 = sphi 0, %s52
      %s54 = sphi 0, %s52
      %s55 = sphi 0, %s54
      %s69 = sphi 0, %s55
      %s73 = sphi 0, %s73
      %s75 = sphi 0, %s73
      %s76 = sphi 0, %s75
      %s90 = sphi 0, %s76
      %s94 = sphi 0, %s94
      %s96 = sphi 0, %s94
      %s97 = sphi 0, %s96
      %s111 = sphi 0, %s97
      %s115 = sphi 0, %s115
      %s117 = sphi 0, %s115
      %s118 = sphi 0, %s117
      %s132 = sphi 0, %s118
      %s138 = sphi 0, %s140
      %s141 = sphi 0, %s138
      %s142 = sphi 0, %s141
      %s158 = sphi 0, %s142
    $region4: #{tpu_custom_call.1} parent=1 // loop_header_branch
      %21 = sbr.rel (%p19) target = $region8
    $region5: #{tpu_custom_call.1} parent=1 // loop_body
      %s23 = ssub.s32 %s18, 1
      %s24 = ssub.s32 %s18, 2
      %s25 = sadd.s32 %s18, 1
      %s26 = ssub.s32 %s18, %s25
      %p27 = scmp.eq.s32.totalorder %s26, 0
      %s29 = sadd.s32 %s28, 1
      %s30 = scalar_select %p27, %s28, %s29
      %p33 = pneg %p27
      %p34 = scmp.eq.s32.totalorder %s18, 1
      %p35 = por %p33, %p34
      %p36 = scmp.ne.s32.totalorder %s28, %s31
      %p37 = scmp.eq.s32.totalorder %s18, 0
      %p38 = por %p36, %p37
      %p39 = scmp.ne.s32.totalorder %s28, %s31
      %p40 = scmp.eq.s32.totalorder %s23, 1
      %p41 = por %p39, %p40
      %p42 = scmp.ne.s32.totalorder %s31, %s32
      %p43 = scmp.eq.s32.totalorder %s23, 0
      %p44 = por %p42, %p43
      %p45 = scmp.ne.s32.totalorder %s31, %s32
      %p46 = scmp.eq.s32.totalorder %s24, 1
      %p47 = por %p45, %p46
      %p49 = scmp.ne.s32.totalorder %s32, %s48
      %p50 = scmp.eq.s32.totalorder %s24, 0
      %p51 = por %p49, %p50
      %s53 = sadd.s32 %s52, 1
      %p56 = scmp.eq.s32.totalorder %s18, 1
      %p57 = scmp.ne.s32.totalorder %s52, %s54
      %p58 = scmp.eq.s32.totalorder %s18, 0
      %p59 = por %p57, %p58
      %p60 = scmp.ne.s32.totalorder %s52, %s54
      %p61 = scmp.eq.s32.totalorder %s23, 1
      %p62 = por %p60, %p61
      %p63 = scmp.ne.s32.totalorder %s54, %s55
      %p64 = scmp.eq.s32.totalorder %s23, 0
      %p65 = por %p63, %p64
      %p66 = scmp.ne.s32.totalorder %s54, %s55
      %p67 = scmp.eq.s32.totalorder %s24, 1
      %p68 = por %p66, %p67
      %p70 = scmp.ne.s32.totalorder %s55, %s69
      %p71 = scmp.eq.s32.totalorder %s24, 0
      %p72 = por %p70, %p71
      %s74 = sadd.s32 %s73, 1
      %p77 = scmp.eq.s32.totalorder %s18, 1
      %p78 = scmp.ne.s32.totalorder %s73, %s75
      %p79 = scmp.eq.s32.totalorder %s18, 0
      %p80 = por %p78, %p79
      %p81 = scmp.ne.s32.totalorder %s73, %s75
      %p82 = scmp.eq.s32.totalorder %s23, 1
      %p83 = por %p81, %p82
      %p84 = scmp.ne.s32.totalorder %s75, %s76
      %p85 = scmp.eq.s32.totalorder %s23, 0
      %p86 = por %p84, %p85
      %p87 = scmp.ne.s32.totalorder %s75, %s76
      %p88 = scmp.eq.s32.totalorder %s24, 1
      %p89 = por %p87, %p88
      %p91 = scmp.ne.s32.totalorder %s76, %s90
      %p92 = scmp.eq.s32.totalorder %s24, 0
      %p93 = por %p91, %p92
      %s95 = sadd.s32 %s94, 1
      %p98 = scmp.eq.s32.totalorder %s18, 1
      %p99 = scmp.ne.s32.totalorder %s94, %s96
      %p100 = scmp.eq.s32.totalorder %s18, 0
      %p101 = por %p99, %p100
      %p102 = scmp.ne.s32.totalorder %s94, %s96
      %p103 = scmp.eq.s32.totalorder %s23, 1
      %p104 = por %p102, %p103
      %p105 = scmp.ne.s32.totalorder %s96, %s97
      %p106 = scmp.eq.s32.totalorder %s23, 0
      %p107 = por %p105, %p106
      %p108 = scmp.ne.s32.totalorder %s96, %s97
      %p109 = scmp.eq.s32.totalorder %s24, 1
      %p110 = por %p108, %p109
      %p112 = scmp.ne.s32.totalorder %s97, %s111
      %p113 = scmp.eq.s32.totalorder %s24, 0
      %p114 = por %p112, %p113
      %s116 = sadd.s32 %s115, 1
      %p119 = scmp.eq.s32.totalorder %s18, 1
      %p120 = scmp.ne.s32.totalorder %s115, %s117
      %p121 = scmp.eq.s32.totalorder %s18, 0
      %p122 = por %p120, %p121
      %p123 = scmp.ne.s32.totalorder %s115, %s117
      %p124 = scmp.eq.s32.totalorder %s23, 1
      %p125 = por %p123, %p124
      %p126 = scmp.ne.s32.totalorder %s117, %s118
      %p127 = scmp.eq.s32.totalorder %s23, 0
      %p128 = por %p126, %p127
      %p129 = scmp.ne.s32.totalorder %s117, %s118
      %p130 = scmp.eq.s32.totalorder %s24, 1
      %p131 = por %p129, %p130
      %p133 = scmp.ne.s32.totalorder %s118, %s132
      %p134 = scmp.eq.s32.totalorder %s24, 0
      %p135 = por %p133, %p134
      %s136 = ssub.s32 %s18, %s25
      %p137 = scmp.eq.s32.totalorder %s136, 0
      %s139 = sadd.s32 %s138, 1
      %s140 = scalar_select %p137, %s138, %s139
      %p143 = pneg %p137
      %p144 = scmp.eq.s32.totalorder %s18, 1
      %p145 = por %p143, %p144
      %p146 = scmp.ne.s32.totalorder %s138, %s141
      %p147 = scmp.eq.s32.totalorder %s18, 0
      %p148 = por %p146, %p147
      %p149 = scmp.ne.s32.totalorder %s138, %s141
      %p150 = scmp.eq.s32.totalorder %s23, 1
      %p151 = por %p149, %p150
      %p152 = scmp.ne.s32.totalorder %s141, %s142
      %p153 = scmp.eq.s32.totalorder %s23, 0
      %p154 = por %p152, %p153
      %p155 = scmp.ne.s32.totalorder %s141, %s142
      %p156 = scmp.eq.s32.totalorder %s24, 1
      %p157 = por %p155, %p156
      %p159 = scmp.ne.s32.totalorder %s142, %s158
      %p160 = scmp.eq.s32.totalorder %s24, 0
      %p161 = por %p159, %p160
      %p162 = scmp.le.s32.totalorder 1, %s18
      %p163 = scmp.lt.s32.totalorder %s18, 3
      %p164 = pnand %p162, %p163
      %p165 = pneg %p164
      // Predicated region
      $region9: #{tpu_custom_call.1} parent=5 // pred_check
        _
      $region10: #{tpu_custom_call.1} parent=5 // pred_check_branch
        %167 = sbr.rel (%p164) target = $region12
      $region11: #{tpu_custom_call.1} parent=5 // pred_region
        %s168 = ssub.s32 %s18, 1
        // Predicated region
        $region13: #{tpu_custom_call.1} parent=11 // pred_check
          %p169 = pneg %p65
        $region14: #{tpu_custom_call.1} parent=11 // pred_check_branch
          %171 = sbr.rel (%p169) target = $region16
        $region15: #{tpu_custom_call.1} parent=11 // pred_region
          %s173 = ssub.s32 2048, 2048
          %174 = vsyncadd [#allocation6], %s173
          %s175 = sshll.u32 [#allocation5], 4
          %s176 = int_to_ptr.vmem [resolvable:$true] %s175
          %181 = dma.hbm_to_vmem [thread:$0]  %s1, 2048, %s176, [#allocation6], 128, 128, 8
        $region16: #{tpu_custom_call.1} parent=11 // pred_fallthru
          _
        // Predicated region
        $region17: #{tpu_custom_call.1} parent=11 // pred_check
          %p182 = pneg %p86
        $region18: #{tpu_custom_call.1} parent=11 // pred_check_branch
          %184 = sbr.rel (%p182) target = $region20
        $region19: #{tpu_custom_call.1} parent=11 // pred_region
          _
        $region20: #{tpu_custom_call.1} parent=11 // pred_fallthru
          _
        // Predicated region
        $region21: #{tpu_custom_call.1} parent=11 // pred_check
          %p185 = pneg %p107
        $region22: #{tpu_custom_call.1} parent=11 // pred_check_branch
          %187 = sbr.rel (%p185) target = $region24
        $region23: #{tpu_custom_call.1} parent=11 // pred_region
          %s189 = ssub.s32 2048, 2048
          %190 = vsyncadd [#allocation6], %s189
          %s191 = sshll.u32 [#allocation7], 4
          %s192 = int_to_ptr.vmem [resolvable:$true] %s191
          %197 = dma.hbm_to_vmem [thread:$0]  %s3, 2048, %s192, [#allocation6], 128, 128, 8
        $region24: #{tpu_custom_call.1} parent=11 // pred_fallthru
          _
        // Predicated region
        $region25: #{tpu_custom_call.1} parent=11 // pred_check
          %p198 = pneg %p128
        $region26: #{tpu_custom_call.1} parent=11 // pred_check_branch
          %200 = sbr.rel (%p198) target = $region28
        $region27: #{tpu_custom_call.1} parent=11 // pred_region
          _
        $region28: #{tpu_custom_call.1} parent=11 // pred_fallthru
          _
      $region12: #{tpu_custom_call.1} parent=5 // pred_fallthru
        _
      %p201 = scmp.lt.s32.totalorder %s18, 2
      // Predicated region
      $region29: #{tpu_custom_call.1} parent=5 // pred_check
        %p202 = pneg %p201
      $region30: #{tpu_custom_call.1} parent=5 // pred_check_branch
        %204 = sbr.rel (%p202) target = $region32
      $region31: #{tpu_custom_call.1} parent=5 // pred_region
        // Predicated region
        $region33: #{tpu_custom_call.1} parent=31 // pred_check
          %p205 = pneg %p38
        $region34: #{tpu_custom_call.1} parent=31 // pred_check_branch
          %207 = sbr.rel (%p205) target = $region36
        $region35: #{tpu_custom_call.1} parent=31 // pred_region
          %s208 = sand.u32 %s28, 1
          %s209 = scalar_lea.sflag [#allocation3], %s208
          %s210 = sand.u32 %s28, 1
          %s211 = smul.addr %s210, 8
          %s212 = scalar_lea.vmem [#allocation2], %s211
          %s214 = ssub.s32 128, 128
          %215 = vsyncadd %s209, %s214
          %s216 = smul.addr %s18, 128
          %s217 = scalar_lea.hbm %s0, %s216
          %s219 = sshll.u32 %s212, 4
          %s220 = int_to_ptr.vmem [resolvable:$true] %s219
          %222 = dma.hbm_to_vmem [thread:$0]  %s217, 128, %s220, %s209
        $region36: #{tpu_custom_call.1} parent=31 // pred_fallthru
          _
      $region32: #{tpu_custom_call.1} parent=5 // pred_fallthru
        _
      %p223 = scmp.le.s32.totalorder 1, %s18
      %p224 = scmp.lt.s32.totalorder %s18, 3
      %p225 = pnand %p223, %p224
      %p226 = pneg %p225
      // Predicated region
      $region37: #{tpu_custom_call.1} parent=5 // pred_check
        _
      $region38: #{tpu_custom_call.1} parent=5 // pred_check_branch
        %228 = sbr.rel (%p225) target = $region40
      $region39: #{tpu_custom_call.1} parent=5 // pred_region
        %s229 = ssub.s32 %s18, 1
        %s230 = sand.u32 %s31, 1
        %s231 = scalar_lea.sflag [#allocation3], %s230
        %s232 = sand.u32 %s31, 1
        %s233 = smul.addr %s232, 8
        %s234 = scalar_lea.vmem [#allocation2], %s233
        // Predicated region
        $region41: #{tpu_custom_call.1} parent=39 // pred_check
          %p235 = pneg %p44
        $region42: #{tpu_custom_call.1} parent=39 // pred_check_branch
          %237 = sbr.rel (%p235) target = $region44
        $region43: #{tpu_custom_call.1} parent=39 // pred_region
          %238 = dma.done %s231, 128
        $region44: #{tpu_custom_call.1} parent=39 // pred_fallthru
          _
        // Predicated region
        $region45: #{tpu_custom_call.1} parent=39 // pred_check
          %p239 = pneg %p65
        $region46: #{tpu_custom_call.1} parent=39 // pred_check_branch
          %241 = sbr.rel (%p239) target = $region48
        $region47: #{tpu_custom_call.1} parent=39 // pred_region
          %242 = dma.done [#allocation6], 2048
        $region48: #{tpu_custom_call.1} parent=39 // pred_fallthru
          _
        // Predicated region
        $region49: #{tpu_custom_call.1} parent=39 // pred_check
          %p243 = pneg %p107
        $region50: #{tpu_custom_call.1} parent=39 // pred_check_branch
          %245 = sbr.rel (%p243) target = $region52
        $region51: #{tpu_custom_call.1} parent=39 // pred_region
          %246 = dma.done [#allocation6], 2048
        $region52: #{tpu_custom_call.1} parent=39 // pred_fallthru
          _
        %s247 = sand.u32 %s31, 1
        %s248 = scalar_lea.sflag [#allocation3], %s247
        %s249 = sand.u32 %s31, 1
        %s250 = smul.addr %s249, 8
        %s251 = scalar_lea.vmem [#allocation2], %s250
        %p252 = pneg %p44
        %p253 = pneg %p41
        %p254 = pneg %p65
        %p255 = pneg %p62
        %p256 = pneg %p86
        %p257 = pneg %p83
        %p258 = pneg %p107
        %p259 = pneg %p104
        %p260 = pneg %p128
        %p261 = pneg %p125
        %p262 = pneg %p154
        %p263 = pneg %p151
        %s264 = sand.u32 %s141, 1
        %s265 = scalar_lea.sflag [#allocation4], %s264
        %s266 = sand.u32 %s141, 1
        %s267 = smul.addr %s266, 8
        %s268 = scalar_lea.vmem [#allocation8], %s267
        %v269 = vld [vmem:[%s234] sm:$0xff]
        %v270 = vld [vmem:[#allocation5] sm:$0xff]
        %v271 = vld [vmem:[#allocation5 + $0x8] sm:$0xff]
        %v272 = vld [vmem:[#allocation5 + $0x10] sm:$0xff]
        %v273 = vld [vmem:[#allocation5 + $0x18] sm:$0xff]
        %v274 = vld [vmem:[#allocation5 + $0x20] sm:$0xff]
        %v275 = vld [vmem:[#allocation5 + $0x28] sm:$0xff]
        %v276 = vld [vmem:[#allocation5 + $0x30] sm:$0xff]
        %v277 = vld [vmem:[#allocation5 + $0x38] sm:$0xff]
        %v278 = vld [vmem:[#allocation5 + $0x40] sm:$0xff]
        %v279 = vld [vmem:[#allocation5 + $0x48] sm:$0xff]
        %v280 = vld [vmem:[#allocation5 + $0x50] sm:$0xff]
        %v281 = vld [vmem:[#allocation5 + $0x58] sm:$0xff]
        %v282 = vld [vmem:[#allocation5 + $0x60] sm:$0xff]
        %v283 = vld [vmem:[#allocation5 + $0x68] sm:$0xff]
        %v284 = vld [vmem:[#allocation5 + $0x70] sm:$0xff]
        %v285 = vld [vmem:[#allocation5 + $0x78] sm:$0xff]
        %v286 = vld [vmem:[%s2] sm:$0x1]
        %v288 = vlaneseq
        %v289 = vshrl.u32 %v288, 7
        %v290 = vsub.s32 0, %v289
        %v291 = vrot.slane %v286, %v290
        %293 = vmatprep.subr.mxu0 0.0
        %v294 = vand.u32 %v285, 4294901760
        %295 = vmatpush1.msra.mxu0 %v294
        %296 = vmatprep.subr.mxu0 0.0
        %v297 = vand.u32 %v284, 4294901760
        %298 = vmatpush1.msra.mxu0 %v297
        %299 = vmatprep.subr.mxu0 0.0
        %v300 = vand.u32 %v283, 4294901760
        %301 = vmatpush1.msra.mxu0 %v300
        %302 = vmatprep.subr.mxu0 0.0
        %v303 = vand.u32 %v282, 4294901760
        %304 = vmatpush1.msra.mxu0 %v303
        %305 = vmatprep.subr.mxu0 0.0
        %v306 = vand.u32 %v281, 4294901760
        %307 = vmatpush1.msra.mxu0 %v306
        %308 = vmatprep.subr.mxu0 0.0
        %v309 = vand.u32 %v280, 4294901760
        %310 = vmatpush1.msra.mxu0 %v309
        %311 = vmatprep.subr.mxu0 0.0
        %v312 = vand.u32 %v279, 4294901760
        %313 = vmatpush1.msra.mxu0 %v312
        %314 = vmatprep.subr.mxu0 0.0
        %v315 = vand.u32 %v278, 4294901760
        %316 = vmatpush1.msra.mxu0 %v315
        %317 = vmatprep.subr.mxu0 0.0
        %v318 = vand.u32 %v277, 4294901760
        %319 = vmatpush1.msra.mxu0 %v318
        %320 = vmatprep.subr.mxu0 0.0
        %v321 = vand.u32 %v276, 4294901760
        %322 = vmatpush1.msra.mxu0 %v321
        %323 = vmatprep.subr.mxu0 0.0
        %v324 = vand.u32 %v275, 4294901760
        %325 = vmatpush1.msra.mxu0 %v324
        %326 = vmatprep.subr.mxu0 0.0
        %v327 = vand.u32 %v274, 4294901760
        %328 = vmatpush1.msra.mxu0 %v327
        %329 = vmatprep.subr.mxu0 0.0
        %v330 = vand.u32 %v273, 4294901760
        %331 = vmatpush1.msra.mxu0 %v330
        %332 = vmatprep.subr.mxu0 0.0
        %v333 = vand.u32 %v272, 4294901760
        %334 = vmatpush1.msra.mxu0 %v333
        %335 = vmatprep.subr.mxu0 0.0
        %v336 = vand.u32 %v271, 4294901760
        %337 = vmatpush1.msra.mxu0 %v336
        %338 = vmatprep.subr.mxu0 0.0
        %v339 = vand.u32 %v270, 4294901760
        %340 = vmatpush1.msra.mxu0 %v339
        %341 = vmatprep.subr.mxu0 0.0
        %342 = vmatpush2.msra.mxu0 0.0
        %343 = vmatprep.subr.mxu0 0.0
        %344 = vmatpush2.msra.mxu0 0.0
        %345 = vmatprep.subr.mxu0 0.0
        %346 = vmatpush2.msra.mxu0 0.0
        %347 = vmatprep.subr.mxu0 0.0
        %348 = vmatpush2.msra.mxu0 0.0
        %349 = vmatprep.subr.mxu0 0.0
        %350 = vmatpush2.msra.mxu0 0.0
        %351 = vmatprep.subr.mxu0 0.0
        %352 = vmatpush2.msra.mxu0 0.0
        %353 = vmatprep.subr.mxu0 0.0
        %354 = vmatpush2.msra.mxu0 0.0
        %355 = vmatprep.subr.mxu0 0.0
        %356 = vmatpush2.msra.mxu0 0.0
        %357 = vmatprep.subr.mxu0 0.0
        %358 = vmatpush2.msra.mxu0 0.0
        %359 = vmatprep.subr.mxu0 0.0
        %360 = vmatpush2.msra.mxu0 0.0
        %361 = vmatprep.subr.mxu0 0.0
        %362 = vmatpush2.msra.mxu0 0.0
        %363 = vmatprep.subr.mxu0 0.0
        %364 = vmatpush2.msra.mxu0 0.0
        %365 = vmatprep.subr.mxu0 0.0
        %366 = vmatpush2.msra.mxu0 0.0
        %367 = vmatprep.subr.mxu0 0.0
        %368 = vmatpush2.msra.mxu0 0.0
        %369 = vmatprep.subr.mxu0 0.0
        %370 = vmatpush2.msra.mxu0 0.0
        %371 = vmatprep.subr.mxu0 0.0
        %372 = vmatpush2.msra.mxu0 0.0
        %373 = vmatprep.mubr.f32.mxu0 0.0
        %v374 = vand.u32 %v269, 4294901760
        %v375 = vsub.f32 %v269, %v374
        %v376 = vand.u32 %v375, 4294901760
        %v377 = vsub.f32 %v375, %v376
        %v378 = vand.u32 %v377, 4294901760
        %379 = vmatmul.mubr.f32.gmra.mxu0 %v378
        %v380 = vpop.f32.mrf.mxu0
        %v381 = vadd.f32 %v291, %v380
        %v382 = vpop.f32.mrf.mxu0
        %383 = vdwg.mxu0
        %384 = vmatprep.subr.mxu0 0.0
        %v385 = vand.u32 %v285, 4294901760
        %v386 = vsub.f32 %v285, %v385
        %v387 = vand.u32 %v386, 4294901760
        %v388 = vsub.f32 %v386, %v387
        %v389 = vand.u32 %v388, 4294901760
        %390 = vmatpush1.msra.mxu0 %v389
        %391 = vmatprep.subr.mxu0 0.0
        %v392 = vand.u32 %v284, 4294901760
        %v393 = vsub.f32 %v284, %v392
        %v394 = vand.u32 %v393, 4294901760
        %v395 = vsub.f32 %v393, %v394
        %v396 = vand.u32 %v395, 4294901760
        %397 = vmatpush1.msra.mxu0 %v396
        %398 = vmatprep.subr.mxu0 0.0
        %v399 = vand.u32 %v283, 4294901760
        %v400 = vsub.f32 %v283, %v399
        %v401 = vand.u32 %v400, 4294901760
        %v402 = vsub.f32 %v400, %v401
        %v403 = vand.u32 %v402, 4294901760
        %404 = vmatpush1.msra.mxu0 %v403
        %405 = vmatprep.subr.mxu0 0.0
        %v406 = vand.u32 %v282, 4294901760
        %v407 = vsub.f32 %v282, %v406
        %v408 = vand.u32 %v407, 4294901760
        %v409 = vsub.f32 %v407, %v408
        %v410 = vand.u32 %v409, 4294901760
        %411 = vmatpush1.msra.mxu0 %v410
        %412 = vmatprep.subr.mxu0 0.0
        %v413 = vand.u32 %v281, 4294901760
        %v414 = vsub.f32 %v281, %v413
        %v415 = vand.u32 %v414, 4294901760
        %v416 = vsub.f32 %v414, %v415
        %v417 = vand.u32 %v416, 4294901760
        %418 = vmatpush1.msra.mxu0 %v417
        %419 = vmatprep.subr.mxu0 0.0
        %v420 = vand.u32 %v280, 4294901760
        %v421 = vsub.f32 %v280, %v420
        %v422 = vand.u32 %v421, 4294901760
        %v423 = vsub.f32 %v421, %v422
        %v424 = vand.u32 %v423, 4294901760
        %425 = vmatpush1.msra.mxu0 %v424
        %426 = vmatprep.subr.mxu0 0.0
        %v427 = vand.u32 %v279, 4294901760
        %v428 = vsub.f32 %v279, %v427
        %v429 = vand.u32 %v428, 4294901760
        %v430 = vsub.f32 %v428, %v429
        %v431 = vand.u32 %v430, 4294901760
        %432 = vmatpush1.msra.mxu0 %v431
        %433 = vmatprep.subr.mxu0 0.0
        %v434 = vand.u32 %v278, 4294901760
        %v435 = vsub.f32 %v278, %v434
        %v436 = vand.u32 %v435, 4294901760
        %v437 = vsub.f32 %v435, %v436
        %v438 = vand.u32 %v437, 4294901760
        %439 = vmatpush1.msra.mxu0 %v438
        %440 = vmatprep.subr.mxu0 0.0
        %v441 = vand.u32 %v277, 4294901760
        %v442 = vsub.f32 %v277, %v441
        %v443 = vand.u32 %v442, 4294901760
        %v444 = vsub.f32 %v442, %v443
        %v445 = vand.u32 %v444, 4294901760
        %446 = vmatpush1.msra.mxu0 %v445
        %447 = vmatprep.subr.mxu0 0.0
        %v448 = vand.u32 %v276, 4294901760
        %v449 = vsub.f32 %v276, %v448
        %v450 = vand.u32 %v449, 4294901760
        %v451 = vsub.f32 %v449, %v450
        %v452 = vand.u32 %v451, 4294901760
        %453 = vmatpush1.msra.mxu0 %v452
        %454 = vmatprep.subr.mxu0 0.0
        %v455 = vand.u32 %v275, 4294901760
        %v456 = vsub.f32 %v275, %v455
        %v457 = vand.u32 %v456, 4294901760
        %v458 = vsub.f32 %v456, %v457
        %v459 = vand.u32 %v458, 4294901760
        %460 = vmatpush1.msra.mxu0 %v459
        %461 = vmatprep.subr.mxu0 0.0
        %v462 = vand.u32 %v274, 4294901760
        %v463 = vsub.f32 %v274, %v462
        %v464 = vand.u32 %v463, 4294901760
        %v465 = vsub.f32 %v463, %v464
        %v466 = vand.u32 %v465, 4294901760
        %467 = vmatpush1.msra.mxu0 %v466
        %468 = vmatprep.subr.mxu0 0.0
        %v469 = vand.u32 %v273, 4294901760
        %v470 = vsub.f32 %v273, %v469
        %v471 = vand.u32 %v470, 4294901760
        %v472 = vsub.f32 %v470, %v471
        %v473 = vand.u32 %v472, 4294901760
        %474 = vmatpush1.msra.mxu0 %v473
        %475 = vmatprep.subr.mxu0 0.0
        %v476 = vand.u32 %v272, 4294901760
        %v477 = vsub.f32 %v272, %v476
        %v478 = vand.u32 %v477, 4294901760
        %v479 = vsub.f32 %v477, %v478
        %v480 = vand.u32 %v479, 4294901760
        %481 = vmatpush1.msra.mxu0 %v480
        %482 = vmatprep.subr.mxu0 0.0
        %v483 = vand.u32 %v271, 4294901760
        %v484 = vsub.f32 %v271, %v483
        %v485 = vand.u32 %v484, 4294901760
        %v486 = vsub.f32 %v484, %v485
        %v487 = vand.u32 %v486, 4294901760
        %488 = vmatpush1.msra.mxu0 %v487
        %489 = vmatprep.subr.mxu0 0.0
        %v490 = vand.u32 %v270, 4294901760
        %v491 = vsub.f32 %v270, %v490
        %v492 = vand.u32 %v491, 4294901760
        %v493 = vsub.f32 %v491, %v492
        %v494 = vand.u32 %v493, 4294901760
        %495 = vmatpush1.msra.mxu0 %v494
        %496 = vmatprep.subr.mxu0 0.0
        %497 = vmatpush2.msra.mxu0 0.0
        %498 = vmatprep.subr.mxu0 0.0
        %499 = vmatpush2.msra.mxu0 0.0
        %500 = vmatprep.subr.mxu0 0.0
        %501 = vmatpush2.msra.mxu0 0.0
        %502 = vmatprep.subr.mxu0 0.0
        %503 = vmatpush2.msra.mxu0 0.0
        %504 = vmatprep.subr.mxu0 0.0
        %505 = vmatpush2.msra.mxu0 0.0
        %506 = vmatprep.subr.mxu0 0.0
        %507 = vmatpush2.msra.mxu0 0.0
        %508 = vmatprep.subr.mxu0 0.0
        %509 = vmatpush2.msra.mxu0 0.0
        %510 = vmatprep.subr.mxu0 0.0
        %511 = vmatpush2.msra.mxu0 0.0
        %512 = vmatprep.subr.mxu0 0.0
        %513 = vmatpush2.msra.mxu0 0.0
        %514 = vmatprep.subr.mxu0 0.0
        %515 = vmatpush2.msra.mxu0 0.0
        %516 = vmatprep.subr.mxu0 0.0
        %517 = vmatpush2.msra.mxu0 0.0
        %518 = vmatprep.subr.mxu0 0.0
        %519 = vmatpush2.msra.mxu0 0.0
        %520 = vmatprep.subr.mxu0 0.0
        %521 = vmatpush2.msra.mxu0 0.0
        %522 = vmatprep.subr.mxu0 0.0
        %523 = vmatpush2.msra.mxu0 0.0
        %524 = vmatprep.subr.mxu0 0.0
        %525 = vmatpush2.msra.mxu0 0.0
        %526 = vmatprep.subr.mxu0 0.0
        %527 = vmatpush2.msra.mxu0 0.0
        %528 = vmatprep.mubr.f32.mxu0 0.0
        %v529 = vand.u32 %v269, 4294901760
        %530 = vmatmul.mubr.f32.gmra.mxu0 %v529
        %v531 = vpop.f32.mrf.mxu0
        %v532 = vadd.f32 %v381, %v531
        %v533 = vpop.f32.mrf.mxu0
        %534 = vdwg.mxu0
        %535 = vmatprep.subr.mxu0 0.0
        %v536 = vand.u32 %v285, 4294901760
        %v537 = vsub.f32 %v285, %v536
        %538 = vmatpush1.msra.mxu0 %v537
        %539 = vmatprep.subr.mxu0 0.0
        %v540 = vand.u32 %v284, 4294901760
        %v541 = vsub.f32 %v284, %v540
        %542 = vmatpush1.msra.mxu0 %v541
        %543 = vmatprep.subr.mxu0 0.0
        %v544 = vand.u32 %v283, 4294901760
        %v545 = vsub.f32 %v283, %v544
        %546 = vmatpush1.msra.mxu0 %v545
        %547 = vmatprep.subr.mxu0 0.0
        %v548 = vand.u32 %v282, 4294901760
        %v549 = vsub.f32 %v282, %v548
        %550 = vmatpush1.msra.mxu0 %v549
        %551 = vmatprep.subr.mxu0 0.0
        %v552 = vand.u32 %v281, 4294901760
        %v553 = vsub.f32 %v281, %v552
        %554 = vmatpush1.msra.mxu0 %v553
        %555 = vmatprep.subr.mxu0 0.0
        %v556 = vand.u32 %v280, 4294901760
        %v557 = vsub.f32 %v280, %v556
        %558 = vmatpush1.msra.mxu0 %v557
        %559 = vmatprep.subr.mxu0 0.0
        %v560 = vand.u32 %v279, 4294901760
        %v561 = vsub.f32 %v279, %v560
        %562 = vmatpush1.msra.mxu0 %v561
        %563 = vmatprep.subr.mxu0 0.0
        %v564 = vand.u32 %v278, 4294901760
        %v565 = vsub.f32 %v278, %v564
        %566 = vmatpush1.msra.mxu0 %v565
        %567 = vmatprep.subr.mxu0 0.0
        %v568 = vand.u32 %v277, 4294901760
        %v569 = vsub.f32 %v277, %v568
        %570 = vmatpush1.msra.mxu0 %v569
        %571 = vmatprep.subr.mxu0 0.0
        %v572 = vand.u32 %v276, 4294901760
        %v573 = vsub.f32 %v276, %v572
        %574 = vmatpush1.msra.mxu0 %v573
        %575 = vmatprep.subr.mxu0 0.0
        %v576 = vand.u32 %v275, 4294901760
        %v577 = vsub.f32 %v275, %v576
        %578 = vmatpush1.msra.mxu0 %v577
        %579 = vmatprep.subr.mxu0 0.0
        %v580 = vand.u32 %v274, 4294901760
        %v581 = vsub.f32 %v274, %v580
        %582 = vmatpush1.msra.mxu0 %v581
        %583 = vmatprep.subr.mxu0 0.0
        %v584 = vand.u32 %v273, 4294901760
        %v585 = vsub.f32 %v273, %v584
        %586 = vmatpush1.msra.mxu0 %v585
        %587 = vmatprep.subr.mxu0 0.0
        %v588 = vand.u32 %v272, 4294901760
        %v589 = vsub.f32 %v272, %v588
        %590 = vmatpush1.msra.mxu0 %v589
        %591 = vmatprep.subr.mxu0 0.0
        %v592 = vand.u32 %v271, 4294901760
        %v593 = vsub.f32 %v271, %v592
        %594 = vmatpush1.msra.mxu0 %v593
        %595 = vmatprep.subr.mxu0 0.0
        %v596 = vand.u32 %v270, 4294901760
        %v597 = vsub.f32 %v270, %v596
        %598 = vmatpush1.msra.mxu0 %v597
        %599 = vmatprep.subr.mxu0 0.0
        %600 = vmatpush2.msra.mxu0 0.0
        %601 = vmatprep.subr.mxu0 0.0
        %602 = vmatpush2.msra.mxu0 0.0
        %603 = vmatprep.subr.mxu0 0.0
        %604 = vmatpush2.msra.mxu0 0.0
        %605 = vmatprep.subr.mxu0 0.0
        %606 = vmatpush2.msra.mxu0 0.0
        %607 = vmatprep.subr.mxu0 0.0
        %608 = vmatpush2.msra.mxu0 0.0
        %609 = vmatprep.subr.mxu0 0.0
        %610 = vmatpush2.msra.mxu0 0.0
        %611 = vmatprep.subr.mxu0 0.0
        %612 = vmatpush2.msra.mxu0 0.0
        %613 = vmatprep.subr.mxu0 0.0
        %614 = vmatpush2.msra.mxu0 0.0
        %615 = vmatprep.subr.mxu0 0.0
        %616 = vmatpush2.msra.mxu0 0.0
        %617 = vmatprep.subr.mxu0 0.0
        %618 = vmatpush2.msra.mxu0 0.0
        %619 = vmatprep.subr.mxu0 0.0
        %620 = vmatpush2.msra.mxu0 0.0
        %621 = vmatprep.subr.mxu0 0.0
        %622 = vmatpush2.msra.mxu0 0.0
        %623 = vmatprep.subr.mxu0 0.0
        %624 = vmatpush2.msra.mxu0 0.0
        %625 = vmatprep.subr.mxu0 0.0
        %626 = vmatpush2.msra.mxu0 0.0
        %627 = vmatprep.subr.mxu0 0.0
        %628 = vmatpush2.msra.mxu0 0.0
        %629 = vmatprep.subr.mxu0 0.0
        %630 = vmatpush2.msra.mxu0 0.0
        %631 = vmatprep.mubr.f32.mxu0 0.0
        %v632 = vand.u32 %v269, 4294901760
        %v633 = vsub.f32 %v269, %v632
        %634 = vmatmul.mubr.f32.gmra.mxu0 %v633
        %v635 = vpop.f32.mrf.mxu0
        %v636 = vadd.f32 %v532, %v635
        %v637 = vpop.f32.mrf.mxu0
        %638 = vdwg.mxu0
        %639 = vmatprep.subr.mxu0 0.0
        %v640 = vand.u32 %v285, 4294901760
        %641 = vmatpush1.msra.mxu0 %v640
        %642 = vmatprep.subr.mxu0 0.0
        %v643 = vand.u32 %v284, 4294901760
        %644 = vmatpush1.msra.mxu0 %v643
        %645 = vmatprep.subr.mxu0 0.0
        %v646 = vand.u32 %v283, 4294901760
        %647 = vmatpush1.msra.mxu0 %v646
        %648 = vmatprep.subr.mxu0 0.0
        %v649 = vand.u32 %v282, 4294901760
        %650 = vmatpush1.msra.mxu0 %v649
        %651 = vmatprep.subr.mxu0 0.0
        %v652 = vand.u32 %v281, 4294901760
        %653 = vmatpush1.msra.mxu0 %v652
        %654 = vmatprep.subr.mxu0 0.0
        %v655 = vand.u32 %v280, 4294901760
        %656 = vmatpush1.msra.mxu0 %v655
        %657 = vmatprep.subr.mxu0 0.0
        %v658 = vand.u32 %v279, 4294901760
        %659 = vmatpush1.msra.mxu0 %v658
        %660 = vmatprep.subr.mxu0 0.0
        %v661 = vand.u32 %v278, 4294901760
        %662 = vmatpush1.msra.mxu0 %v661
        %663 = vmatprep.subr.mxu0 0.0
        %v664 = vand.u32 %v277, 4294901760
        %665 = vmatpush1.msra.mxu0 %v664
        %666 = vmatprep.subr.mxu0 0.0
        %v667 = vand.u32 %v276, 4294901760
        %668 = vmatpush1.msra.mxu0 %v667
        %669 = vmatprep.subr.mxu0 0.0
        %v670 = vand.u32 %v275, 4294901760
        %671 = vmatpush1.msra.mxu0 %v670
        %672 = vmatprep.subr.mxu0 0.0
        %v673 = vand.u32 %v274, 4294901760
        %674 = vmatpush1.msra.mxu0 %v673
        %675 = vmatprep.subr.mxu0 0.0
        %v676 = vand.u32 %v273, 4294901760
        %677 = vmatpush1.msra.mxu0 %v676
        %678 = vmatprep.subr.mxu0 0.0
        %v679 = vand.u32 %v272, 4294901760
        %680 = vmatpush1.msra.mxu0 %v679
        %681 = vmatprep.subr.mxu0 0.0
        %v682 = vand.u32 %v271, 4294901760
        %683 = vmatpush1.msra.mxu0 %v682
        %684 = vmatprep.subr.mxu0 0.0
        %v685 = vand.u32 %v270, 4294901760
        %686 = vmatpush1.msra.mxu0 %v685
        %687 = vmatprep.subr.mxu0 0.0
        %688 = vmatpush2.msra.mxu0 0.0
        %689 = vmatprep.subr.mxu0 0.0
        %690 = vmatpush2.msra.mxu0 0.0
        %691 = vmatprep.subr.mxu0 0.0
        %692 = vmatpush2.msra.mxu0 0.0
        %693 = vmatprep.subr.mxu0 0.0
        %694 = vmatpush2.msra.mxu0 0.0
        %695 = vmatprep.subr.mxu0 0.0
        %696 = vmatpush2.msra.mxu0 0.0
        %697 = vmatprep.subr.mxu0 0.0
        %698 = vmatpush2.msra.mxu0 0.0
        %699 = vmatprep.subr.mxu0 0.0
        %700 = vmatpush2.msra.mxu0 0.0
        %701 = vmatprep.subr.mxu0 0.0
        %702 = vmatpush2.msra.mxu0 0.0
        %703 = vmatprep.subr.mxu0 0.0
        %704 = vmatpush2.msra.mxu0 0.0
        %705 = vmatprep.subr.mxu0 0.0
        %706 = vmatpush2.msra.mxu0 0.0
        %707 = vmatprep.subr.mxu0 0.0
        %708 = vmatpush2.msra.mxu0 0.0
        %709 = vmatprep.subr.mxu0 0.0
        %710 = vmatpush2.msra.mxu0 0.0
        %711 = vmatprep.subr.mxu0 0.0
        %712 = vmatpush2.msra.mxu0 0.0
        %713 = vmatprep.subr.mxu0 0.0
        %714 = vmatpush2.msra.mxu0 0.0
        %715 = vmatprep.subr.mxu0 0.0
        %716 = vmatpush2.msra.mxu0 0.0
        %717 = vmatprep.subr.mxu0 0.0
        %718 = vmatpush2.msra.mxu0 0.0
        %719 = vmatprep.mubr.f32.mxu0 0.0
        %v720 = vand.u32 %v269, 4294901760
        %v721 = vsub.f32 %v269, %v720
        %v722 = vand.u32 %v721, 4294901760
        %723 = vmatmul.mubr.f32.gmra.mxu0 %v722
        %v724 = vpop.f32.mrf.mxu0
        %v725 = vadd.f32 %v636, %v724
        %v726 = vpop.f32.mrf.mxu0
        %727 = vdwg.mxu0
        %728 = vmatprep.subr.mxu0 0.0
        %v729 = vand.u32 %v285, 4294901760
        %v730 = vsub.f32 %v285, %v729
        %v731 = vand.u32 %v730, 4294901760
        %732 = vmatpush1.msra.mxu0 %v731
        %733 = vmatprep.subr.mxu0 0.0
        %v734 = vand.u32 %v284, 4294901760
        %v735 = vsub.f32 %v284, %v734
        %v736 = vand.u32 %v735, 4294901760
        %737 = vmatpush1.msra.mxu0 %v736
        %738 = vmatprep.subr.mxu0 0.0
        %v739 = vand.u32 %v283, 4294901760
        %v740 = vsub.f32 %v283, %v739
        %v741 = vand.u32 %v740, 4294901760
        %742 = vmatpush1.msra.mxu0 %v741
        %743 = vmatprep.subr.mxu0 0.0
        %v744 = vand.u32 %v282, 4294901760
        %v745 = vsub.f32 %v282, %v744
        %v746 = vand.u32 %v745, 4294901760
        %747 = vmatpush1.msra.mxu0 %v746
        %748 = vmatprep.subr.mxu0 0.0
        %v749 = vand.u32 %v281, 4294901760
        %v750 = vsub.f32 %v281, %v749
        %v751 = vand.u32 %v750, 4294901760
        %752 = vmatpush1.msra.mxu0 %v751
        %753 = vmatprep.subr.mxu0 0.0
        %v754 = vand.u32 %v280, 4294901760
        %v755 = vsub.f32 %v280, %v754
        %v756 = vand.u32 %v755, 4294901760
        %757 = vmatpush1.msra.mxu0 %v756
        %758 = vmatprep.subr.mxu0 0.0
        %v759 = vand.u32 %v279, 4294901760
        %v760 = vsub.f32 %v279, %v759
        %v761 = vand.u32 %v760, 4294901760
        %762 = vmatpush1.msra.mxu0 %v761
        %763 = vmatprep.subr.mxu0 0.0
        %v764 = vand.u32 %v278, 4294901760
        %v765 = vsub.f32 %v278, %v764
        %v766 = vand.u32 %v765, 4294901760
        %767 = vmatpush1.msra.mxu0 %v766
        %768 = vmatprep.subr.mxu0 0.0
        %v769 = vand.u32 %v277, 4294901760
        %v770 = vsub.f32 %v277, %v769
        %v771 = vand.u32 %v770, 4294901760
        %772 = vmatpush1.msra.mxu0 %v771
        %773 = vmatprep.subr.mxu0 0.0
        %v774 = vand.u32 %v276, 4294901760
        %v775 = vsub.f32 %v276, %v774
        %v776 = vand.u32 %v775, 4294901760
        %777 = vmatpush1.msra.mxu0 %v776
        %778 = vmatprep.subr.mxu0 0.0
        %v779 = vand.u32 %v275, 4294901760
        %v780 = vsub.f32 %v275, %v779
        %v781 = vand.u32 %v780, 4294901760
        %782 = vmatpush1.msra.mxu0 %v781
        %783 = vmatprep.subr.mxu0 0.0
        %v784 = vand.u32 %v274, 4294901760
        %v785 = vsub.f32 %v274, %v784
        %v786 = vand.u32 %v785, 4294901760
        %787 = vmatpush1.msra.mxu0 %v786
        %788 = vmatprep.subr.mxu0 0.0
        %v789 = vand.u32 %v273, 4294901760
        %v790 = vsub.f32 %v273, %v789
        %v791 = vand.u32 %v790, 4294901760
        %792 = vmatpush1.msra.mxu0 %v791
        %793 = vmatprep.subr.mxu0 0.0
        %v794 = vand.u32 %v272, 4294901760
        %v795 = vsub.f32 %v272, %v794
        %v796 = vand.u32 %v795, 4294901760
        %797 = vmatpush1.msra.mxu0 %v796
        %798 = vmatprep.subr.mxu0 0.0
        %v799 = vand.u32 %v271, 4294901760
        %v800 = vsub.f32 %v271, %v799
        %v801 = vand.u32 %v800, 4294901760
        %802 = vmatpush1.msra.mxu0 %v801
        %803 = vmatprep.subr.mxu0 0.0
        %v804 = vand.u32 %v270, 4294901760
        %v805 = vsub.f32 %v270, %v804
        %v806 = vand.u32 %v805, 4294901760
        %807 = vmatpush1.msra.mxu0 %v806
        %808 = vmatprep.subr.mxu0 0.0
        %809 = vmatpush2.msra.mxu0 0.0
        %810 = vmatprep.subr.mxu0 0.0
        %811 = vmatpush2.msra.mxu0 0.0
        %812 = vmatprep.subr.mxu0 0.0
        %813 = vmatpush2.msra.mxu0 0.0
        %814 = vmatprep.subr.mxu0 0.0
        %815 = vmatpush2.msra.mxu0 0.0
        %816 = vmatprep.subr.mxu0 0.0
        %817 = vmatpush2.msra.mxu0 0.0
        %818 = vmatprep.subr.mxu0 0.0
        %819 = vmatpush2.msra.mxu0 0.0
        %820 = vmatprep.subr.mxu0 0.0
        %821 = vmatpush2.msra.mxu0 0.0
        %822 = vmatprep.subr.mxu0 0.0
        %823 = vmatpush2.msra.mxu0 0.0
        %824 = vmatprep.subr.mxu0 0.0
        %825 = vmatpush2.msra.mxu0 0.0
        %826 = vmatprep.subr.mxu0 0.0
        %827 = vmatpush2.msra.mxu0 0.0
        %828 = vmatprep.subr.mxu0 0.0
        %829 = vmatpush2.msra.mxu0 0.0
        %830 = vmatprep.subr.mxu0 0.0
        %831 = vmatpush2.msra.mxu0 0.0
        %832 = vmatprep.subr.mxu0 0.0
        %833 = vmatpush2.msra.mxu0 0.0
        %834 = vmatprep.subr.mxu0 0.0
        %835 = vmatpush2.msra.mxu0 0.0
        %836 = vmatprep.subr.mxu0 0.0
        %837 = vmatpush2.msra.mxu0 0.0
        %838 = vmatprep.subr.mxu0 0.0
        %839 = vmatpush2.msra.mxu0 0.0
        %840 = vmatprep.mubr.f32.mxu0 0.0
        %v841 = vand.u32 %v269, 4294901760
        %842 = vmatmul.mubr.f32.gmra.mxu0 %v841
        %v843 = vpop.f32.mrf.mxu0
        %v844 = vadd.f32 %v725, %v843
        %v845 = vpop.f32.mrf.mxu0
        %846 = vdwg.mxu0
        %847 = vmatprep.subr.mxu0 0.0
        %v848 = vand.u32 %v285, 4294901760
        %849 = vmatpush1.msra.mxu0 %v848
        %850 = vmatprep.subr.mxu0 0.0
        %v851 = vand.u32 %v284, 4294901760
        %852 = vmatpush1.msra.mxu0 %v851
        %853 = vmatprep.subr.mxu0 0.0
        %v854 = vand.u32 %v283, 4294901760
        %855 = vmatpush1.msra.mxu0 %v854
        %856 = vmatprep.subr.mxu0 0.0
        %v857 = vand.u32 %v282, 4294901760
        %858 = vmatpush1.msra.mxu0 %v857
        %859 = vmatprep.subr.mxu0 0.0
        %v860 = vand.u32 %v281, 4294901760
        %861 = vmatpush1.msra.mxu0 %v860
        %862 = vmatprep.subr.mxu0 0.0
        %v863 = vand.u32 %v280, 4294901760
        %864 = vmatpush1.msra.mxu0 %v863
        %865 = vmatprep.subr.mxu0 0.0
        %v866 = vand.u32 %v279, 4294901760
        %867 = vmatpush1.msra.mxu0 %v866
        %868 = vmatprep.subr.mxu0 0.0
        %v869 = vand.u32 %v278, 4294901760
        %870 = vmatpush1.msra.mxu0 %v869
        %871 = vmatprep.subr.mxu0 0.0
        %v872 = vand.u32 %v277, 4294901760
        %873 = vmatpush1.msra.mxu0 %v872
        %874 = vmatprep.subr.mxu0 0.0
        %v875 = vand.u32 %v276, 4294901760
        %876 = vmatpush1.msra.mxu0 %v875
        %877 = vmatprep.subr.mxu0 0.0
        %v878 = vand.u32 %v275, 4294901760
        %879 = vmatpush1.msra.mxu0 %v878
        %880 = vmatprep.subr.mxu0 0.0
        %v881 = vand.u32 %v274, 4294901760
        %882 = vmatpush1.msra.mxu0 %v881
        %883 = vmatprep.subr.mxu0 0.0
        %v884 = vand.u32 %v273, 4294901760
        %885 = vmatpush1.msra.mxu0 %v884
        %886 = vmatprep.subr.mxu0 0.0
        %v887 = vand.u32 %v272, 4294901760
        %888 = vmatpush1.msra.mxu0 %v887
        %889 = vmatprep.subr.mxu0 0.0
        %v890 = vand.u32 %v271, 4294901760
        %891 = vmatpush1.msra.mxu0 %v890
        %892 = vmatprep.subr.mxu0 0.0
        %v893 = vand.u32 %v270, 4294901760
        %894 = vmatpush1.msra.mxu0 %v893
        %895 = vmatprep.subr.mxu0 0.0
        %896 = vmatpush2.msra.mxu0 0.0
        %897 = vmatprep.subr.mxu0 0.0
        %898 = vmatpush2.msra.mxu0 0.0
        %899 = vmatprep.subr.mxu0 0.0
        %900 = vmatpush2.msra.mxu0 0.0
        %901 = vmatprep.subr.mxu0 0.0
        %902 = vmatpush2.msra.mxu0 0.0
        %903 = vmatprep.subr.mxu0 0.0
        %904 = vmatpush2.msra.mxu0 0.0
        %905 = vmatprep.subr.mxu0 0.0
        %906 = vmatpush2.msra.mxu0 0.0
        %907 = vmatprep.subr.mxu0 0.0
        %908 = vmatpush2.msra.mxu0 0.0
        %909 = vmatprep.subr.mxu0 0.0
        %910 = vmatpush2.msra.mxu0 0.0
        %911 = vmatprep.subr.mxu0 0.0
        %912 = vmatpush2.msra.mxu0 0.0
        %913 = vmatprep.subr.mxu0 0.0
        %914 = vmatpush2.msra.mxu0 0.0
        %915 = vmatprep.subr.mxu0 0.0
        %916 = vmatpush2.msra.mxu0 0.0
        %917 = vmatprep.subr.mxu0 0.0
        %918 = vmatpush2.msra.mxu0 0.0
        %919 = vmatprep.subr.mxu0 0.0
        %920 = vmatpush2.msra.mxu0 0.0
        %921 = vmatprep.subr.mxu0 0.0
        %922 = vmatpush2.msra.mxu0 0.0
        %923 = vmatprep.subr.mxu0 0.0
        %924 = vmatpush2.msra.mxu0 0.0
        %925 = vmatprep.subr.mxu0 0.0
        %926 = vmatpush2.msra.mxu0 0.0
        %927 = vmatprep.mubr.f32.mxu0 0.0
        %v928 = vand.u32 %v269, 4294901760
        %929 = vmatmul.mubr.f32.gmra.mxu0 %v928
        %v930 = vpop.f32.mrf.mxu0
        %v931 = vadd.f32 %v844, %v930
        %v932 = vpop.f32.mrf.mxu0
        %933 = vdwg.mxu0
        %v934 = vmul.f32 %v931, %v931
        %v935 = vmul.f32 %v931, %v934
        %v936 = vmul.f32 %v935, 0.044715
        %v937 = vadd.f32 %v931, %v936
        %v938 = vmul.f32 %v937, 0.7978846
        %v939 = vtanh.pop %v938
        %v940 = vadd.f32 %v939, 1.0
        %v941 = vmul.f32 %v940, 0.5
        %v942 = vmul.f32 %v931, %v941
        %v943 = vld [vmem:[#allocation7] sm:$0xff]
        %v944 = vld [vmem:[#allocation7 + $0x8] sm:$0xff]
        %v945 = vld [vmem:[#allocation7 + $0x10] sm:$0xff]
        %v946 = vld [vmem:[#allocation7 + $0x18] sm:$0xff]
        %v947 = vld [vmem:[#allocation7 + $0x20] sm:$0xff]
        %v948 = vld [vmem:[#allocation7 + $0x28] sm:$0xff]
        %v949 = vld [vmem:[#allocation7 + $0x30] sm:$0xff]
        %v950 = vld [vmem:[#allocation7 + $0x38] sm:$0xff]
        %v951 = vld [vmem:[#allocation7 + $0x40] sm:$0xff]
        %v952 = vld [vmem:[#allocation7 + $0x48] sm:$0xff]
        %v953 = vld [vmem:[#allocation7 + $0x50] sm:$0xff]
        %v954 = vld [vmem:[#allocation7 + $0x58] sm:$0xff]
        %v955 = vld [vmem:[#allocation7 + $0x60] sm:$0xff]
        %v956 = vld [vmem:[#allocation7 + $0x68] sm:$0xff]
        %v957 = vld [vmem:[#allocation7 + $0x70] sm:$0xff]
        %v958 = vld [vmem:[#allocation7 + $0x78] sm:$0xff]
        %v959 = vld [vmem:[%s4] sm:$0x1]
        %v961 = vlaneseq
        %v962 = vshrl.u32 %v961, 7
        %v963 = vsub.s32 0, %v962
        %v964 = vrot.slane %v959, %v963
        %966 = vmatprep.subr.mxu0 0.0
        %v967 = vand.u32 %v958, 4294901760
        %968 = vmatpush1.msra.mxu0 %v967
        %969 = vmatprep.subr.mxu0 0.0
        %v970 = vand.u32 %v957, 4294901760
        %971 = vmatpush1.msra.mxu0 %v970
        %972 = vmatprep.subr.mxu0 0.0
        %v973 = vand.u32 %v956, 4294901760
        %974 = vmatpush1.msra.mxu0 %v973
        %975 = vmatprep.subr.mxu0 0.0
        %v976 = vand.u32 %v955, 4294901760
        %977 = vmatpush1.msra.mxu0 %v976
        %978 = vmatprep.subr.mxu0 0.0
        %v979 = vand.u32 %v954, 4294901760
        %980 = vmatpush1.msra.mxu0 %v979
        %981 = vmatprep.subr.mxu0 0.0
        %v982 = vand.u32 %v953, 4294901760
        %983 = vmatpush1.msra.mxu0 %v982
        %984 = vmatprep.subr.mxu0 0.0
        %v985 = vand.u32 %v952, 4294901760
        %986 = vmatpush1.msra.mxu0 %v985
        %987 = vmatprep.subr.mxu0 0.0
        %v988 = vand.u32 %v951, 4294901760
        %989 = vmatpush1.msra.mxu0 %v988
        %990 = vmatprep.subr.mxu0 0.0
        %v991 = vand.u32 %v950, 4294901760
        %992 = vmatpush1.msra.mxu0 %v991
        %993 = vmatprep.subr.mxu0 0.0
        %v994 = vand.u32 %v949, 4294901760
        %995 = vmatpush1.msra.mxu0 %v994
        %996 = vmatprep.subr.mxu0 0.0
        %v997 = vand.u32 %v948, 4294901760
        %998 = vmatpush1.msra.mxu0 %v997
        %999 = vmatprep.subr.mxu0 0.0
        %v1000 = vand.u32 %v947, 4294901760
        %1001 = vmatpush1.msra.mxu0 %v1000
        %1002 = vmatprep.subr.mxu0 0.0
        %v1003 = vand.u32 %v946, 4294901760
        %1004 = vmatpush1.msra.mxu0 %v1003
        %1005 = vmatprep.subr.mxu0 0.0
        %v1006 = vand.u32 %v945, 4294901760
        %1007 = vmatpush1.msra.mxu0 %v1006
        %1008 = vmatprep.subr.mxu0 0.0
        %v1009 = vand.u32 %v944, 4294901760
        %1010 = vmatpush1.msra.mxu0 %v1009
        %1011 = vmatprep.subr.mxu0 0.0
        %v1012 = vand.u32 %v943, 4294901760
        %1013 = vmatpush1.msra.mxu0 %v1012
        %1014 = vmatprep.subr.mxu0 0.0
        %1015 = vmatpush2.msra.mxu0 0.0
        %1016 = vmatprep.subr.mxu0 0.0
        %1017 = vmatpush2.msra.mxu0 0.0
        %1018 = vmatprep.subr.mxu0 0.0
        %1019 = vmatpush2.msra.mxu0 0.0
        %1020 = vmatprep.subr.mxu0 0.0
        %1021 = vmatpush2.msra.mxu0 0.0
        %1022 = vmatprep.subr.mxu0 0.0
        %1023 = vmatpush2.msra.mxu0 0.0
        %1024 = vmatprep.subr.mxu0 0.0
        %1025 = vmatpush2.msra.mxu0 0.0
        %1026 = vmatprep.subr.mxu0 0.0
        %1027 = vmatpush2.msra.mxu0 0.0
        %1028 = vmatprep.subr.mxu0 0.0
        %1029 = vmatpush2.msra.mxu0 0.0
        %1030 = vmatprep.subr.mxu0 0.0
        %1031 = vmatpush2.msra.mxu0 0.0
        %1032 = vmatprep.subr.mxu0 0.0
        %1033 = vmatpush2.msra.mxu0 0.0
        %1034 = vmatprep.subr.mxu0 0.0
        %1035 = vmatpush2.msra.mxu0 0.0
        %1036 = vmatprep.subr.mxu0 0.0
        %1037 = vmatpush2.msra.mxu0 0.0
        %1038 = vmatprep.subr.mxu0 0.0
        %1039 = vmatpush2.msra.mxu0 0.0
        %1040 = vmatprep.subr.mxu0 0.0
        %1041 = vmatpush2.msra.mxu0 0.0
        %1042 = vmatprep.subr.mxu0 0.0
        %1043 = vmatpush2.msra.mxu0 0.0
        %1044 = vmatprep.subr.mxu0 0.0
        %1045 = vmatpush2.msra.mxu0 0.0
        %1046 = vmatprep.mubr.f32.mxu0 0.0
        %v1047 = vand.u32 %v942, 4294901760
        %v1048 = vsub.f32 %v942, %v1047
        %v1049 = vand.u32 %v1048, 4294901760
        %v1050 = vsub.f32 %v1048, %v1049
        %v1051 = vand.u32 %v1050, 4294901760
        %1052 = vmatmul.mubr.f32.gmra.mxu0 %v1051
        %v1053 = vpop.f32.mrf.mxu0
        %v1054 = vadd.f32 %v964, %v1053
        %v1055 = vpop.f32.mrf.mxu0
        %1056 = vdwg.mxu0
        %1057 = vmatprep.subr.mxu0 0.0
        %v1058 = vand.u32 %v958, 4294901760
        %v1059 = vsub.f32 %v958, %v1058
        %v1060 = vand.u32 %v1059, 4294901760
        %v1061 = vsub.f32 %v1059, %v1060
        %v1062 = vand.u32 %v1061, 4294901760
        %1063 = vmatpush1.msra.mxu0 %v1062
        %1064 = vmatprep.subr.mxu0 0.0
        %v1065 = vand.u32 %v957, 4294901760
        %v1066 = vsub.f32 %v957, %v1065
        %v1067 = vand.u32 %v1066, 4294901760
        %v1068 = vsub.f32 %v1066, %v1067
        %v1069 = vand.u32 %v1068, 4294901760
        %1070 = vmatpush1.msra.mxu0 %v1069
        %1071 = vmatprep.subr.mxu0 0.0
        %v1072 = vand.u32 %v956, 4294901760
        %v1073 = vsub.f32 %v956, %v1072
        %v1074 = vand.u32 %v1073, 4294901760
        %v1075 = vsub.f32 %v1073, %v1074
        %v1076 = vand.u32 %v1075, 4294901760
        %1077 = vmatpush1.msra.mxu0 %v1076
        %1078 = vmatprep.subr.mxu0 0.0
        %v1079 = vand.u32 %v955, 4294901760
        %v1080 = vsub.f32 %v955, %v1079
        %v1081 = vand.u32 %v1080, 4294901760
        %v1082 = vsub.f32 %v1080, %v1081
        %v1083 = vand.u32 %v1082, 4294901760
        %1084 = vmatpush1.msra.mxu0 %v1083
        %1085 = vmatprep.subr.mxu0 0.0
        %v1086 = vand.u32 %v954, 4294901760
        %v1087 = vsub.f32 %v954, %v1086
        %v1088 = vand.u32 %v1087, 4294901760
        %v1089 = vsub.f32 %v1087, %v1088
        %v1090 = vand.u32 %v1089, 4294901760
        %1091 = vmatpush1.msra.mxu0 %v1090
        %1092 = vmatprep.subr.mxu0 0.0
        %v1093 = vand.u32 %v953, 4294901760
        %v1094 = vsub.f32 %v953, %v1093
        %v1095 = vand.u32 %v1094, 4294901760
        %v1096 = vsub.f32 %v1094, %v1095
        %v1097 = vand.u32 %v1096, 4294901760
        %1098 = vmatpush1.msra.mxu0 %v1097
        %1099 = vmatprep.subr.mxu0 0.0
        %v1100 = vand.u32 %v952, 4294901760
        %v1101 = vsub.f32 %v952, %v1100
        %v1102 = vand.u32 %v1101, 4294901760
        %v1103 = vsub.f32 %v1101, %v1102
        %v1104 = vand.u32 %v1103, 4294901760
        %1105 = vmatpush1.msra.mxu0 %v1104
        %1106 = vmatprep.subr.mxu0 0.0
        %v1107 = vand.u32 %v951, 4294901760
        %v1108 = vsub.f32 %v951, %v1107
        %v1109 = vand.u32 %v1108, 4294901760
        %v1110 = vsub.f32 %v1108, %v1109
        %v1111 = vand.u32 %v1110, 4294901760
        %1112 = vmatpush1.msra.mxu0 %v1111
        %1113 = vmatprep.subr.mxu0 0.0
        %v1114 = vand.u32 %v950, 4294901760
        %v1115 = vsub.f32 %v950, %v1114
        %v1116 = vand.u32 %v1115, 4294901760
        %v1117 = vsub.f32 %v1115, %v1116
        %v1118 = vand.u32 %v1117, 4294901760
        %1119 = vmatpush1.msra.mxu0 %v1118
        %1120 = vmatprep.subr.mxu0 0.0
        %v1121 = vand.u32 %v949, 4294901760
        %v1122 = vsub.f32 %v949, %v1121
        %v1123 = vand.u32 %v1122, 4294901760
        %v1124 = vsub.f32 %v1122, %v1123
        %v1125 = vand.u32 %v1124, 4294901760
        %1126 = vmatpush1.msra.mxu0 %v1125
        %1127 = vmatprep.subr.mxu0 0.0
        %v1128 = vand.u32 %v948, 4294901760
        %v1129 = vsub.f32 %v948, %v1128
        %v1130 = vand.u32 %v1129, 4294901760
        %v1131 = vsub.f32 %v1129, %v1130
        %v1132 = vand.u32 %v1131, 4294901760
        %1133 = vmatpush1.msra.mxu0 %v1132
        %1134 = vmatprep.subr.mxu0 0.0
        %v1135 = vand.u32 %v947, 4294901760
        %v1136 = vsub.f32 %v947, %v1135
        %v1137 = vand.u32 %v1136, 4294901760
        %v1138 = vsub.f32 %v1136, %v1137
        %v1139 = vand.u32 %v1138, 4294901760
        %1140 = vmatpush1.msra.mxu0 %v1139
        %1141 = vmatprep.subr.mxu0 0.0
        %v1142 = vand.u32 %v946, 4294901760
        %v1143 = vsub.f32 %v946, %v1142
        %v1144 = vand.u32 %v1143, 4294901760
        %v1145 = vsub.f32 %v1143, %v1144
        %v1146 = vand.u32 %v1145, 4294901760
        %1147 = vmatpush1.msra.mxu0 %v1146
        %1148 = vmatprep.subr.mxu0 0.0
        %v1149 = vand.u32 %v945, 4294901760
        %v1150 = vsub.f32 %v945, %v1149
        %v1151 = vand.u32 %v1150, 4294901760
        %v1152 = vsub.f32 %v1150, %v1151
        %v1153 = vand.u32 %v1152, 4294901760
        %1154 = vmatpush1.msra.mxu0 %v1153
        %1155 = vmatprep.subr.mxu0 0.0
        %v1156 = vand.u32 %v944, 4294901760
        %v1157 = vsub.f32 %v944, %v1156
        %v1158 = vand.u32 %v1157, 4294901760
        %v1159 = vsub.f32 %v1157, %v1158
        %v1160 = vand.u32 %v1159, 4294901760
        %1161 = vmatpush1.msra.mxu0 %v1160
        %1162 = vmatprep.subr.mxu0 0.0
        %v1163 = vand.u32 %v943, 4294901760
        %v1164 = vsub.f32 %v943, %v1163
        %v1165 = vand.u32 %v1164, 4294901760
        %v1166 = vsub.f32 %v1164, %v1165
        %v1167 = vand.u32 %v1166, 4294901760
        %1168 = vmatpush1.msra.mxu0 %v1167
        %1169 = vmatprep.subr.mxu0 0.0
        %1170 = vmatpush2.msra.mxu0 0.0
        %1171 = vmatprep.subr.mxu0 0.0
        %1172 = vmatpush2.msra.mxu0 0.0
        %1173 = vmatprep.subr.mxu0 0.0
        %1174 = vmatpush2.msra.mxu0 0.0
        %1175 = vmatprep.subr.mxu0 0.0
        %1176 = vmatpush2.msra.mxu0 0.0
        %1177 = vmatprep.subr.mxu0 0.0
        %1178 = vmatpush2.msra.mxu0 0.0
        %1179 = vmatprep.subr.mxu0 0.0
        %1180 = vmatpush2.msra.mxu0 0.0
        %1181 = vmatprep.subr.mxu0 0.0
        %1182 = vmatpush2.msra.mxu0 0.0
        %1183 = vmatprep.subr.mxu0 0.0
        %1184 = vmatpush2.msra.mxu0 0.0
        %1185 = vmatprep.subr.mxu0 0.0
        %1186 = vmatpush2.msra.mxu0 0.0
        %1187 = vmatprep.subr.mxu0 0.0
        %1188 = vmatpush2.msra.mxu0 0.0
        %1189 = vmatprep.subr.mxu0 0.0
        %1190 = vmatpush2.msra.mxu0 0.0
        %1191 = vmatprep.subr.mxu0 0.0
        %1192 = vmatpush2.msra.mxu0 0.0
        %1193 = vmatprep.subr.mxu0 0.0
        %1194 = vmatpush2.msra.mxu0 0.0
        %1195 = vmatprep.subr.mxu0 0.0
        %1196 = vmatpush2.msra.mxu0 0.0
        %1197 = vmatprep.subr.mxu0 0.0
        %1198 = vmatpush2.msra.mxu0 0.0
        %1199 = vmatprep.subr.mxu0 0.0
        %1200 = vmatpush2.msra.mxu0 0.0
        %1201 = vmatprep.mubr.f32.mxu0 0.0
        %v1202 = vand.u32 %v942, 4294901760
        %1203 = vmatmul.mubr.f32.gmra.mxu0 %v1202
        %v1204 = vpop.f32.mrf.mxu0
        %v1205 = vadd.f32 %v1054, %v1204
        %v1206 = vpop.f32.mrf.mxu0
        %1207 = vdwg.mxu0
        %1208 = vmatprep.subr.mxu0 0.0
        %v1209 = vand.u32 %v958, 4294901760
        %v1210 = vsub.f32 %v958, %v1209
        %1211 = vmatpush1.msra.mxu0 %v1210
        %1212 = vmatprep.subr.mxu0 0.0
        %v1213 = vand.u32 %v957, 4294901760
        %v1214 = vsub.f32 %v957, %v1213
        %1215 = vmatpush1.msra.mxu0 %v1214
        %1216 = vmatprep.subr.mxu0 0.0
        %v1217 = vand.u32 %v956, 4294901760
        %v1218 = vsub.f32 %v956, %v1217
        %1219 = vmatpush1.msra.mxu0 %v1218
        %1220 = vmatprep.subr.mxu0 0.0
        %v1221 = vand.u32 %v955, 4294901760
        %v1222 = vsub.f32 %v955, %v1221
        %1223 = vmatpush1.msra.mxu0 %v1222
        %1224 = vmatprep.subr.mxu0 0.0
        %v1225 = vand.u32 %v954, 4294901760
        %v1226 = vsub.f32 %v954, %v1225
        %1227 = vmatpush1.msra.mxu0 %v1226
        %1228 = vmatprep.subr.mxu0 0.0
        %v1229 = vand.u32 %v953, 4294901760
        %v1230 = vsub.f32 %v953, %v1229
        %1231 = vmatpush1.msra.mxu0 %v1230
        %1232 = vmatprep.subr.mxu0 0.0
        %v1233 = vand.u32 %v952, 4294901760
        %v1234 = vsub.f32 %v952, %v1233
        %1235 = vmatpush1.msra.mxu0 %v1234
        %1236 = vmatprep.subr.mxu0 0.0
        %v1237 = vand.u32 %v951, 4294901760
        %v1238 = vsub.f32 %v951, %v1237
        %1239 = vmatpush1.msra.mxu0 %v1238
        %1240 = vmatprep.subr.mxu0 0.0
        %v1241 = vand.u32 %v950, 4294901760
        %v1242 = vsub.f32 %v950, %v1241
        %1243 = vmatpush1.msra.mxu0 %v1242
        %1244 = vmatprep.subr.mxu0 0.0
        %v1245 = vand.u32 %v949, 4294901760
        %v1246 = vsub.f32 %v949, %v1245
        %1247 = vmatpush1.msra.mxu0 %v1246
        %1248 = vmatprep.subr.mxu0 0.0
        %v1249 = vand.u32 %v948, 4294901760
        %v1250 = vsub.f32 %v948, %v1249
        %1251 = vmatpush1.msra.mxu0 %v1250
        %1252 = vmatprep.subr.mxu0 0.0
        %v1253 = vand.u32 %v947, 4294901760
        %v1254 = vsub.f32 %v947, %v1253
        %1255 = vmatpush1.msra.mxu0 %v1254
        %1256 = vmatprep.subr.mxu0 0.0
        %v1257 = vand.u32 %v946, 4294901760
        %v1258 = vsub.f32 %v946, %v1257
        %1259 = vmatpush1.msra.mxu0 %v1258
        %1260 = vmatprep.subr.mxu0 0.0
        %v1261 = vand.u32 %v945, 4294901760
        %v1262 = vsub.f32 %v945, %v1261
        %1263 = vmatpush1.msra.mxu0 %v1262
        %1264 = vmatprep.subr.mxu0 0.0
        %v1265 = vand.u32 %v944, 4294901760
        %v1266 = vsub.f32 %v944, %v1265
        %1267 = vmatpush1.msra.mxu0 %v1266
        %1268 = vmatprep.subr.mxu0 0.0
        %v1269 = vand.u32 %v943, 4294901760
        %v1270 = vsub.f32 %v943, %v1269
        %1271 = vmatpush1.msra.mxu0 %v1270
        %1272 = vmatprep.subr.mxu0 0.0
        %1273 = vmatpush2.msra.mxu0 0.0
        %1274 = vmatprep.subr.mxu0 0.0
        %1275 = vmatpush2.msra.mxu0 0.0
        %1276 = vmatprep.subr.mxu0 0.0
        %1277 = vmatpush2.msra.mxu0 0.0
        %1278 = vmatprep.subr.mxu0 0.0
        %1279 = vmatpush2.msra.mxu0 0.0
        %1280 = vmatprep.subr.mxu0 0.0
        %1281 = vmatpush2.msra.mxu0 0.0
        %1282 = vmatprep.subr.mxu0 0.0
        %1283 = vmatpush2.msra.mxu0 0.0
        %1284 = vmatprep.subr.mxu0 0.0
        %1285 = vmatpush2.msra.mxu0 0.0
        %1286 = vmatprep.subr.mxu0 0.0
        %1287 = vmatpush2.msra.mxu0 0.0
        %1288 = vmatprep.subr.mxu0 0.0
        %1289 = vmatpush2.msra.mxu0 0.0
        %1290 = vmatprep.subr.mxu0 0.0
        %1291 = vmatpush2.msra.mxu0 0.0
        %1292 = vmatprep.subr.mxu0 0.0
        %1293 = vmatpush2.msra.mxu0 0.0
        %1294 = vmatprep.subr.mxu0 0.0
        %1295 = vmatpush2.msra.mxu0 0.0
        %1296 = vmatprep.subr.mxu0 0.0
        %1297 = vmatpush2.msra.mxu0 0.0
        %1298 = vmatprep.subr.mxu0 0.0
        %1299 = vmatpush2.msra.mxu0 0.0
        %1300 = vmatprep.subr.mxu0 0.0
        %1301 = vmatpush2.msra.mxu0 0.0
        %1302 = vmatprep.subr.mxu0 0.0
        %1303 = vmatpush2.msra.mxu0 0.0
        %1304 = vmatprep.mubr.f32.mxu0 0.0
        %v1305 = vand.u32 %v942, 4294901760
        %v1306 = vsub.f32 %v942, %v1305
        %1307 = vmatmul.mubr.f32.gmra.mxu0 %v1306
        %v1308 = vpop.f32.mrf.mxu0
        %v1309 = vadd.f32 %v1205, %v1308
        %v1310 = vpop.f32.mrf.mxu0
        %1311 = vdwg.mxu0
        %1312 = vmatprep.subr.mxu0 0.0
        %v1313 = vand.u32 %v958, 4294901760
        %1314 = vmatpush1.msra.mxu0 %v1313
        %1315 = vmatprep.subr.mxu0 0.0
        %v1316 = vand.u32 %v957, 4294901760
        %1317 = vmatpush1.msra.mxu0 %v1316
        %1318 = vmatprep.subr.mxu0 0.0
        %v1319 = vand.u32 %v956, 4294901760
        %1320 = vmatpush1.msra.mxu0 %v1319
        %1321 = vmatprep.subr.mxu0 0.0
        %v1322 = vand.u32 %v955, 4294901760
        %1323 = vmatpush1.msra.mxu0 %v1322
        %1324 = vmatprep.subr.mxu0 0.0
        %v1325 = vand.u32 %v954, 4294901760
        %1326 = vmatpush1.msra.mxu0 %v1325
        %1327 = vmatprep.subr.mxu0 0.0
        %v1328 = vand.u32 %v953, 4294901760
        %1329 = vmatpush1.msra.mxu0 %v1328
        %1330 = vmatprep.subr.mxu0 0.0
        %v1331 = vand.u32 %v952, 4294901760
        %1332 = vmatpush1.msra.mxu0 %v1331
        %1333 = vmatprep.subr.mxu0 0.0
        %v1334 = vand.u32 %v951, 4294901760
        %1335 = vmatpush1.msra.mxu0 %v1334
        %1336 = vmatprep.subr.mxu0 0.0
        %v1337 = vand.u32 %v950, 4294901760
        %1338 = vmatpush1.msra.mxu0 %v1337
        %1339 = vmatprep.subr.mxu0 0.0
        %v1340 = vand.u32 %v949, 4294901760
        %1341 = vmatpush1.msra.mxu0 %v1340
        %1342 = vmatprep.subr.mxu0 0.0
        %v1343 = vand.u32 %v948, 4294901760
        %1344 = vmatpush1.msra.mxu0 %v1343
        %1345 = vmatprep.subr.mxu0 0.0
        %v1346 = vand.u32 %v947, 4294901760
        %1347 = vmatpush1.msra.mxu0 %v1346
        %1348 = vmatprep.subr.mxu0 0.0
        %v1349 = vand.u32 %v946, 4294901760
        %1350 = vmatpush1.msra.mxu0 %v1349
        %1351 = vmatprep.subr.mxu0 0.0
        %v1352 = vand.u32 %v945, 4294901760
        %1353 = vmatpush1.msra.mxu0 %v1352
        %1354 = vmatprep.subr.mxu0 0.0
        %v1355 = vand.u32 %v944, 4294901760
        %1356 = vmatpush1.msra.mxu0 %v1355
        %1357 = vmatprep.subr.mxu0 0.0
        %v1358 = vand.u32 %v943, 4294901760
        %1359 = vmatpush1.msra.mxu0 %v1358
        %1360 = vmatprep.subr.mxu0 0.0
        %1361 = vmatpush2.msra.mxu0 0.0
        %1362 = vmatprep.subr.mxu0 0.0
        %1363 = vmatpush2.msra.mxu0 0.0
        %1364 = vmatprep.subr.mxu0 0.0
        %1365 = vmatpush2.msra.mxu0 0.0
        %1366 = vmatprep.subr.mxu0 0.0
        %1367 = vmatpush2.msra.mxu0 0.0
        %1368 = vmatprep.subr.mxu0 0.0
        %1369 = vmatpush2.msra.mxu0 0.0
        %1370 = vmatprep.subr.mxu0 0.0
        %1371 = vmatpush2.msra.mxu0 0.0
        %1372 = vmatprep.subr.mxu0 0.0
        %1373 = vmatpush2.msra.mxu0 0.0
        %1374 = vmatprep.subr.mxu0 0.0
        %1375 = vmatpush2.msra.mxu0 0.0
        %1376 = vmatprep.subr.mxu0 0.0
        %1377 = vmatpush2.msra.mxu0 0.0
        %1378 = vmatprep.subr.mxu0 0.0
        %1379 = vmatpush2.msra.mxu0 0.0
        %1380 = vmatprep.subr.mxu0 0.0
        %1381 = vmatpush2.msra.mxu0 0.0
        %1382 = vmatprep.subr.mxu0 0.0
        %1383 = vmatpush2.msra.mxu0 0.0
        %1384 = vmatprep.subr.mxu0 0.0
        %1385 = vmatpush2.msra.mxu0 0.0
        %1386 = vmatprep.subr.mxu0 0.0
        %1387 = vmatpush2.msra.mxu0 0.0
        %1388 = vmatprep.subr.mxu0 0.0
        %1389 = vmatpush2.msra.mxu0 0.0
        %1390 = vmatprep.subr.mxu0 0.0
        %1391 = vmatpush2.msra.mxu0 0.0
        %1392 = vmatprep.mubr.f32.mxu0 0.0
        %v1393 = vand.u32 %v942, 4294901760
        %v1394 = vsub.f32 %v942, %v1393
        %v1395 = vand.u32 %v1394, 4294901760
        %1396 = vmatmul.mubr.f32.gmra.mxu0 %v1395
        %v1397 = vpop.f32.mrf.mxu0
        %v1398 = vadd.f32 %v1309, %v1397
        %v1399 = vpop.f32.mrf.mxu0
        %1400 = vdwg.mxu0
        %1401 = vmatprep.subr.mxu0 0.0
        %v1402 = vand.u32 %v958, 4294901760
        %v1403 = vsub.f32 %v958, %v1402
        %v1404 = vand.u32 %v1403, 4294901760
        %1405 = vmatpush1.msra.mxu0 %v1404
        %1406 = vmatprep.subr.mxu0 0.0
        %v1407 = vand.u32 %v957, 4294901760
        %v1408 = vsub.f32 %v957, %v1407
        %v1409 = vand.u32 %v1408, 4294901760
        %1410 = vmatpush1.msra.mxu0 %v1409
        %1411 = vmatprep.subr.mxu0 0.0
        %v1412 = vand.u32 %v956, 4294901760
        %v1413 = vsub.f32 %v956, %v1412
        %v1414 = vand.u32 %v1413, 4294901760
        %1415 = vmatpush1.msra.mxu0 %v1414
        %1416 = vmatprep.subr.mxu0 0.0
        %v1417 = vand.u32 %v955, 4294901760
        %v1418 = vsub.f32 %v955, %v1417
        %v1419 = vand.u32 %v1418, 4294901760
        %1420 = vmatpush1.msra.mxu0 %v1419
        %1421 = vmatprep.subr.mxu0 0.0
        %v1422 = vand.u32 %v954, 4294901760
        %v1423 = vsub.f32 %v954, %v1422
        %v1424 = vand.u32 %v1423, 4294901760
        %1425 = vmatpush1.msra.mxu0 %v1424
        %1426 = vmatprep.subr.mxu0 0.0
        %v1427 = vand.u32 %v953, 4294901760
        %v1428 = vsub.f32 %v953, %v1427
        %v1429 = vand.u32 %v1428, 4294901760
        %1430 = vmatpush1.msra.mxu0 %v1429
        %1431 = vmatprep.subr.mxu0 0.0
        %v1432 = vand.u32 %v952, 4294901760
        %v1433 = vsub.f32 %v952, %v1432
        %v1434 = vand.u32 %v1433, 4294901760
        %1435 = vmatpush1.msra.mxu0 %v1434
        %1436 = vmatprep.subr.mxu0 0.0
        %v1437 = vand.u32 %v951, 4294901760
        %v1438 = vsub.f32 %v951, %v1437
        %v1439 = vand.u32 %v1438, 4294901760
        %1440 = vmatpush1.msra.mxu0 %v1439
        %1441 = vmatprep.subr.mxu0 0.0
        %v1442 = vand.u32 %v950, 4294901760
        %v1443 = vsub.f32 %v950, %v1442
        %v1444 = vand.u32 %v1443, 4294901760
        %1445 = vmatpush1.msra.mxu0 %v1444
        %1446 = vmatprep.subr.mxu0 0.0
        %v1447 = vand.u32 %v949, 4294901760
        %v1448 = vsub.f32 %v949, %v1447
        %v1449 = vand.u32 %v1448, 4294901760
        %1450 = vmatpush1.msra.mxu0 %v1449
        %1451 = vmatprep.subr.mxu0 0.0
        %v1452 = vand.u32 %v948, 4294901760
        %v1453 = vsub.f32 %v948, %v1452
        %v1454 = vand.u32 %v1453, 4294901760
        %1455 = vmatpush1.msra.mxu0 %v1454
        %1456 = vmatprep.subr.mxu0 0.0
        %v1457 = vand.u32 %v947, 4294901760
        %v1458 = vsub.f32 %v947, %v1457
        %v1459 = vand.u32 %v1458, 4294901760
        %1460 = vmatpush1.msra.mxu0 %v1459
        %1461 = vmatprep.subr.mxu0 0.0
        %v1462 = vand.u32 %v946, 4294901760
        %v1463 = vsub.f32 %v946, %v1462
        %v1464 = vand.u32 %v1463, 4294901760
        %1465 = vmatpush1.msra.mxu0 %v1464
        %1466 = vmatprep.subr.mxu0 0.0
        %v1467 = vand.u32 %v945, 4294901760
        %v1468 = vsub.f32 %v945, %v1467
        %v1469 = vand.u32 %v1468, 4294901760
        %1470 = vmatpush1.msra.mxu0 %v1469
        %1471 = vmatprep.subr.mxu0 0.0
        %v1472 = vand.u32 %v944, 4294901760
        %v1473 = vsub.f32 %v944, %v1472
        %v1474 = vand.u32 %v1473, 4294901760
        %1475 = vmatpush1.msra.mxu0 %v1474
        %1476 = vmatprep.subr.mxu0 0.0
        %v1477 = vand.u32 %v943, 4294901760
        %v1478 = vsub.f32 %v943, %v1477
        %v1479 = vand.u32 %v1478, 4294901760
        %1480 = vmatpush1.msra.mxu0 %v1479
        %1481 = vmatprep.subr.mxu0 0.0
        %1482 = vmatpush2.msra.mxu0 0.0
        %1483 = vmatprep.subr.mxu0 0.0
        %1484 = vmatpush2.msra.mxu0 0.0
        %1485 = vmatprep.subr.mxu0 0.0
        %1486 = vmatpush2.msra.mxu0 0.0
        %1487 = vmatprep.subr.mxu0 0.0
        %1488 = vmatpush2.msra.mxu0 0.0
        %1489 = vmatprep.subr.mxu0 0.0
        %1490 = vmatpush2.msra.mxu0 0.0
        %1491 = vmatprep.subr.mxu0 0.0
        %1492 = vmatpush2.msra.mxu0 0.0
        %1493 = vmatprep.subr.mxu0 0.0
        %1494 = vmatpush2.msra.mxu0 0.0
        %1495 = vmatprep.subr.mxu0 0.0
        %1496 = vmatpush2.msra.mxu0 0.0
        %1497 = vmatprep.subr.mxu0 0.0
        %1498 = vmatpush2.msra.mxu0 0.0
        %1499 = vmatprep.subr.mxu0 0.0
        %1500 = vmatpush2.msra.mxu0 0.0
        %1501 = vmatprep.subr.mxu0 0.0
        %1502 = vmatpush2.msra.mxu0 0.0
        %1503 = vmatprep.subr.mxu0 0.0
        %1504 = vmatpush2.msra.mxu0 0.0
        %1505 = vmatprep.subr.mxu0 0.0
        %1506 = vmatpush2.msra.mxu0 0.0
        %1507 = vmatprep.subr.mxu0 0.0
        %1508 = vmatpush2.msra.mxu0 0.0
        %1509 = vmatprep.subr.mxu0 0.0
        %1510 = vmatpush2.msra.mxu0 0.0
        %1511 = vmatprep.subr.mxu0 0.0
        %1512 = vmatpush2.msra.mxu0 0.0
        %1513 = vmatprep.mubr.f32.mxu0 0.0
        %v1514 = vand.u32 %v942, 4294901760
        %1515 = vmatmul.mubr.f32.gmra.mxu0 %v1514
        %v1516 = vpop.f32.mrf.mxu0
        %v1517 = vadd.f32 %v1398, %v1516
        %v1518 = vpop.f32.mrf.mxu0
        %1519 = vdwg.mxu0
        %1520 = vmatprep.subr.mxu0 0.0
        %v1521 = vand.u32 %v958, 4294901760
        %1522 = vmatpush1.msra.mxu0 %v1521
        %1523 = vmatprep.subr.mxu0 0.0
        %v1524 = vand.u32 %v957, 4294901760
        %1525 = vmatpush1.msra.mxu0 %v1524
        %1526 = vmatprep.subr.mxu0 0.0
        %v1527 = vand.u32 %v956, 4294901760
        %1528 = vmatpush1.msra.mxu0 %v1527
        %1529 = vmatprep.subr.mxu0 0.0
        %v1530 = vand.u32 %v955, 4294901760
        %1531 = vmatpush1.msra.mxu0 %v1530
        %1532 = vmatprep.subr.mxu0 0.0
        %v1533 = vand.u32 %v954, 4294901760
        %1534 = vmatpush1.msra.mxu0 %v1533
        %1535 = vmatprep.subr.mxu0 0.0
        %v1536 = vand.u32 %v953, 4294901760
        %1537 = vmatpush1.msra.mxu0 %v1536
        %1538 = vmatprep.subr.mxu0 0.0
        %v1539 = vand.u32 %v952, 4294901760
        %1540 = vmatpush1.msra.mxu0 %v1539
        %1541 = vmatprep.subr.mxu0 0.0
        %v1542 = vand.u32 %v951, 4294901760
        %1543 = vmatpush1.msra.mxu0 %v1542
        %1544 = vmatprep.subr.mxu0 0.0
        %v1545 = vand.u32 %v950, 4294901760
        %1546 = vmatpush1.msra.mxu0 %v1545
        %1547 = vmatprep.subr.mxu0 0.0
        %v1548 = vand.u32 %v949, 4294901760
        %1549 = vmatpush1.msra.mxu0 %v1548
        %1550 = vmatprep.subr.mxu0 0.0
        %v1551 = vand.u32 %v948, 4294901760
        %1552 = vmatpush1.msra.mxu0 %v1551
        %1553 = vmatprep.subr.mxu0 0.0
        %v1554 = vand.u32 %v947, 4294901760
        %1555 = vmatpush1.msra.mxu0 %v1554
        %1556 = vmatprep.subr.mxu0 0.0
        %v1557 = vand.u32 %v946, 4294901760
        %1558 = vmatpush1.msra.mxu0 %v1557
        %1559 = vmatprep.subr.mxu0 0.0
        %v1560 = vand.u32 %v945, 4294901760
        %1561 = vmatpush1.msra.mxu0 %v1560
        %1562 = vmatprep.subr.mxu0 0.0
        %v1563 = vand.u32 %v944, 4294901760
        %1564 = vmatpush1.msra.mxu0 %v1563
        %1565 = vmatprep.subr.mxu0 0.0
        %v1566 = vand.u32 %v943, 4294901760
        %1567 = vmatpush1.msra.mxu0 %v1566
        %1568 = vmatprep.subr.mxu0 0.0
        %1569 = vmatpush2.msra.mxu0 0.0
        %1570 = vmatprep.subr.mxu0 0.0
        %1571 = vmatpush2.msra.mxu0 0.0
        %1572 = vmatprep.subr.mxu0 0.0
        %1573 = vmatpush2.msra.mxu0 0.0
        %1574 = vmatprep.subr.mxu0 0.0
        %1575 = vmatpush2.msra.mxu0 0.0
        %1576 = vmatprep.subr.mxu0 0.0
        %1577 = vmatpush2.msra.mxu0 0.0
        %1578 = vmatprep.subr.mxu0 0.0
        %1579 = vmatpush2.msra.mxu0 0.0
        %1580 = vmatprep.subr.mxu0 0.0
        %1581 = vmatpush2.msra.mxu0 0.0
        %1582 = vmatprep.subr.mxu0 0.0
        %1583 = vmatpush2.msra.mxu0 0.0
        %1584 = vmatprep.subr.mxu0 0.0
        %1585 = vmatpush2.msra.mxu0 0.0
        %1586 = vmatprep.subr.mxu0 0.0
        %1587 = vmatpush2.msra.mxu0 0.0
        %1588 = vmatprep.subr.mxu0 0.0
        %1589 = vmatpush2.msra.mxu0 0.0
        %1590 = vmatprep.subr.mxu0 0.0
        %1591 = vmatpush2.msra.mxu0 0.0
        %1592 = vmatprep.subr.mxu0 0.0
        %1593 = vmatpush2.msra.mxu0 0.0
        %1594 = vmatprep.subr.mxu0 0.0
        %1595 = vmatpush2.msra.mxu0 0.0
        %1596 = vmatprep.subr.mxu0 0.0
        %1597 = vmatpush2.msra.mxu0 0.0
        %1598 = vmatprep.subr.mxu0 0.0
        %1599 = vmatpush2.msra.mxu0 0.0
        %1600 = vmatprep.mubr.f32.mxu0 0.0
        %v1601 = vand.u32 %v942, 4294901760
        %1602 = vmatmul.mubr.f32.gmra.mxu0 %v1601
        %v1603 = vpop.f32.mrf.mxu0
        %v1604 = vadd.f32 %v1517, %v1603
        %v1605 = vpop.f32.mrf.mxu0
        %1606 = vdwg.mxu0
        %1607 = vst [vmem:[%s268] sm:$0xff] %v1604
        %s1608 = sand.u32 %s141, 1
        %s1609 = scalar_lea.sflag [#allocation4], %s1608
        %s1610 = sand.u32 %s141, 1
        %s1611 = smul.addr %s1610, 8
        %s1612 = scalar_lea.vmem [#allocation8], %s1611
        // Predicated region
        $region53: #{tpu_custom_call.1} parent=39 // pred_check
          %p1613 = pneg %p151
        $region54: #{tpu_custom_call.1} parent=39 // pred_check_branch
          %1615 = sbr.rel (%p1613) target = $region56
        $region55: #{tpu_custom_call.1} parent=39 // pred_region
          %s1617 = ssub.s32 128, 128
          %1618 = vsyncadd %s1609, %s1617
          %s1619 = smul.addr %s23, 128
          %s1620 = scalar_lea.hbm %s5, %s1619
          %s1622 = sshll.u32 %s1612, 4
          %s1623 = int_to_ptr.vmem [resolvable:$true] %s1622
          %1625 = dma.vmem_to_hbm [thread:$0]  %s1623, 128, %s1620, %s1609
        $region56: #{tpu_custom_call.1} parent=39 // pred_fallthru
          _
      $region40: #{tpu_custom_call.1} parent=5 // pred_fallthru
        _
      %p1626 = scmp.le.s32.totalorder 2, %s18
      // Predicated region
      $region57: #{tpu_custom_call.1} parent=5 // pred_check
        %p1627 = pneg %p1626
      $region58: #{tpu_custom_call.1} parent=5 // pred_check_branch
        %1629 = sbr.rel (%p1627) target = $region60
      $region59: #{tpu_custom_call.1} parent=5 // pred_region
        %s1630 = ssub.s32 %s18, 2
        // Predicated region
        $region61: #{tpu_custom_call.1} parent=59 // pred_check
          %p1631 = pneg %p157
        $region62: #{tpu_custom_call.1} parent=59 // pred_check_branch
          %1633 = sbr.rel (%p1631) target = $region64
        $region63: #{tpu_custom_call.1} parent=59 // pred_region
          %s1634 = sand.u32 %s142, 1
          %s1635 = scalar_lea.sflag [#allocation4], %s1634
          %s1636 = sand.u32 %s142, 1
          %s1637 = smul.addr %s1636, 8
          %s1638 = scalar_lea.vmem [#allocation8], %s1637
          %1639 = dma.done %s1635, 128
        $region64: #{tpu_custom_call.1} parent=59 // pred_fallthru
          _
      $region60: #{tpu_custom_call.1} parent=5 // pred_fallthru
        _
    $region6: #{tpu_custom_call.1} parent=1 // loop_footer
      %s22 = sadd.s32 1, %s18
    $region7: #{tpu_custom_call.1} parent=1 // loop_footer_branch
      %17 = sbr.rel target = $region3
    $region8: #{tpu_custom_call.1} parent=1 // loop_exit
      _
    %1640 = vsyncpa [#allocation3], 1
    %s1641 = scalar_lea.sflag [#allocation3], 1
    %1642 = vsyncpa %s1641, 1
    %1643 = vsyncpa [#allocation6], 1
    %1644 = vsyncpa [#allocation4], 1
    %s1645 = scalar_lea.sflag [#allocation4], 1
    %1646 = vsyncpa %s1645, 1

</llo_original>
